<compile_context>
chip_gen: v7x
topology: tpu7x:2x2x1
jax: 0.10.0
libtpu: 0.0.40
codegen_flags: <defaults>
</compile_context>

<pallas_src>
import functools

import jax
import jax.numpy as jnp
from jax.experimental import pallas as pl
from jax.experimental.pallas import tpu as pltpu


# --------------------------------------------------------------------------- #
# Pallas kernel: fused conv3x3 (VMEM im2col over dh only) + BN + ReLU
# --------------------------------------------------------------------------- #
def _conv_bn_relu_kernel(x_ref, w_ref, bn_ref, o_ref, *, kh, trow, kwc, kblk):
    """One (trow, wo/2, 2*cout) packed output tile of relu(conv(x)*scale + bias).

    x_ref : (Hp, Wo/2, 2*kwc)     bf16, dw/even-odd pre-expanded padded image
    w_ref : (2*kblk, 2*cout)      bf16, block-diagonal [[W,0],[0,W]] weights
    bn_ref: (2, 2*cout)           f32,  row 0 = scale, row 1 = bias (tiled x2)
    o_ref : (trow, Wo/2, 2*cout)  bf16, lanes = [pixel 2w | pixel 2w+1]
    """
    wo2 = o_ref.shape[1]
    r0 = pl.multiple_of(pl.program_id(1) * trow, trow)

    # Gather the kh row taps (leading-dim slices only -> no lane/sublane shifts)
    even, odd = [], []
    for dh in range(kh):
        tap = x_ref[pl.ds(r0 + dh, trow), :, :]        # (trow, wo2, 2*kwc)
        even.append(tap[:, :, :kwc])                   # patch of pixel 2w
        odd.append(tap[:, :, kwc:])                    # patch of pixel 2w+1

    pieces = list(even)
    if kblk > kh * kwc:                                # pad each K block to 128
        zpad = jnp.zeros((trow, wo2, kblk - kh * kwc), dtype=x_ref.dtype)
        pieces.append(zpad)
        pieces += odd
        pieces.append(zpad)
    else:
        pieces += odd

    lhs = jnp.concatenate(pieces, axis=-1)             # (trow, wo2, 2*kblk)
    lhs = lhs.reshape(trow * wo2, 2 * kblk)            # merge leading dims (free)

    # bf16 x bf16 -> f32 accumulation on the MXU; block-diag RHS packs 2 pixels
    # into the 128-lane output directly.
    y = jnp.dot(lhs, w_ref[...], preferred_element_type=jnp.float32)

    bn = bn_ref[...]                                   # (2, 2*cout) f32
    y = jnp.maximum(y * bn[0:1, :] + bn[1:2, :], 0.0)  # BN (inference) + ReLU

    # Split leading dim only (free); minor dim stays 128 -> dense stores.
    o_ref[...] = y.astype(o_ref.dtype).reshape(trow, wo2, o_ref.shape[-1])


# --------------------------------------------------------------------------- #
# One-time parameter preparation (outside the per-call path)
# --------------------------------------------------------------------------- #
def prepare_conv_bn_params(w_hwio, bn_scale, bn_bias, *, c8=8, kblk=128):
    kh, kw, cin, cout = w_hwio.shape
    assert cin <= c8 and kh * kw * c8 <= kblk
    wk = jnp.pad(w_hwio, ((0, 0), (0, 0), (0, c8 - cin), (0, 0)))
    wk = wk.reshape(kh * kw * c8, cout)                       # rows = (dh, dw, c)
    wk = jnp.pad(wk, ((0, kblk - kh * kw * c8), (0, 0)))      # K -> 128
    z = jnp.zeros_like(wk)
    w2 = jnp.concatenate(                                      # block-diagonal
        [jnp.concatenate([wk, z], axis=1),
         jnp.concatenate([z, wk], axis=1)], axis=0).astype(jnp.bfloat16)
    bn2 = jnp.stack([jnp.concatenate([bn_scale, bn_scale]),
                     jnp.concatenate([bn_bias, bn_bias])]).astype(jnp.float32)
    return w2, bn2                                             # (2*kblk, 2*cout), (2, 2*cout)


# --------------------------------------------------------------------------- #
# Forward wrapper (NHWC in, NHWC out; no transposes on the kernel path)
# --------------------------------------------------------------------------- #
def res_input_layer_fwd(x_nhwc, w2, bn2, *, kh=3, kw=3, c8=8):
    """relu(bn(conv3x3_s1_p1(x))) via one fused Pallas TPU kernel.

    x_nhwc: (B, H, W, cin) f32/bf16.  Returns (B, H, W, cout) bf16 (NHWC).
    """
    B, H, W, cin = x_nhwc.shape
    ho, wo = H, W                                   # stride 1, padding 1
    hp = H + 2
    assert cin <= c8 and wo % 2 == 0
    kblk2, cout2 = w2.shape
    kblk, cout = kblk2 // 2, cout2 // 2
    kwc = kw * c8

    # Lane-friendly input prep: bf16 cast, halo + channel pad, then pre-expand
    # the dw taps and split even/odd W pixels -> minor dim 2*kw*c8 = 48.
    xp = jnp.pad(x_nhwc.astype(jnp.bfloat16),
                 ((0, 0), (1, 1), (1, 1), (0, c8 - cin)))     # (B, hp, wp, c8)
    cols = []
    for half in range(2):                                     # even / odd pixel
        for dw in range(kw):
            s = half + dw
            cols.append(xp[:, :, s:s + wo - 1:2, :])          # (B, hp, wo/2, c8)
    x_pair = jnp.concatenate(cols, axis=-1)                   # (B, hp, wo/2, 2*kwc)

    # Collapse the row axis; keep >=2 parallel grid steps for v7x megacore.
    nrow = 1 if (B >= 2 or ho % 2) else 2
    trow = ho // nrow

    kernel = functools.partial(_conv_bn_relu_kernel,
                               kh=kh, trow=trow, kwc=kwc, kblk=kblk)
    out = pl.pallas_call(
        kernel,
        out_shape=jax.ShapeDtypeStruct((B, ho, wo // 2, cout2), jnp.bfloat16),
        grid=(B, nrow),
        in_specs=[
            # Whole pre-expanded image for batch element b; same block index
            # across the row axis -> stays resident in VMEM (one DMA per image).
            pl.BlockSpec((None, hp, wo // 2, 2 * kwc), lambda b, i: (b, 0, 0, 0)),
            pl.BlockSpec((kblk2, cout2), lambda b, i: (0, 0)),
            pl.BlockSpec((2, cout2), lambda b, i: (0, 0)),
        ],
        out_specs=pl.BlockSpec((None, trow, wo // 2, cout2),
                               lambda b, i: (b, i, 0, 0)),
        compiler_params=pltpu.CompilerParams(
            dimension_semantics=("parallel", "parallel")),
    )(x_pair, w2, bn2)

    # Free row-major unpack: (B, ho, wo/2, 2*cout) -> (B, ho, wo, cout).
    return out.reshape(B, ho, wo, cout)


# --------------------------------------------------------------------------- #
# Deterministic parameter initialization (inference-mode BN folding)
# --------------------------------------------------------------------------- #
def _init_bn(key, c, eps=1e-5):
    k1, k2, k3, k4 = jax.random.split(key, 4)
    gamma = 1.0 + 0.1 * jax.random.normal(k1, (c,), jnp.float32)
    beta = 0.1 * jax.random.normal(k2, (c,), jnp.float32)
    mean = 0.1 * jax.random.normal(k3, (c,), jnp.float32)
    var = jax.random.uniform(k4, (c,), jnp.float32, minval=0.5, maxval=1.5)
    scale = gamma / jnp.sqrt(var + eps)
    bias = beta - mean * scale
    return scale, bias


# --------------------------------------------------------------------------- #
if __name__ == "__main__":
    key = jax.random.PRNGKey(0)
    kx, kw_, kbn = jax.random.split(key, 3)

    B, CIN, H, W, COUT = 2, 3, 32, 32, 64
    # NHWC activations: NCHW<->NHWC transposes are kept off the kernel path.
    x = jax.random.normal(kx, (B, H, W, CIN), jnp.float32)
    w = ((2.0 / (3 * 3 * CIN)) ** 0.5
         * jax.random.normal(kw_, (3, 3, CIN, COUT), jnp.float32))   # HWIO
    scale, bias = _init_bn(kbn, COUT)

    # Prepared once, outside the per-call path.
    w2, bn2 = prepare_conv_bn_params(w, scale, bias)

    fwd = jax.jit(functools.partial(res_input_layer_fwd, w2=w2, bn2=bn2))
    out = fwd(x)
    jax.block_until_ready(out)

    assert out.shape == (B, H, W, COUT)
    out_f32 = out.astype(jnp.float32)
    assert bool(jnp.all(jnp.isfinite(out_f32)))

    # f32 reference (conv + inference-mode BN + ReLU) sanity check (NHWC).
    ref = jax.lax.conv_general_dilated(
        x, w, window_strides=(1, 1), padding=((1, 1), (1, 1)),
        dimension_numbers=("NHWC", "HWIO", "NHWC"))
    ref = jnp.maximum(ref * scale + bias, 0.0)
    rel_err = jnp.linalg.norm(out_f32 - ref) / jnp.linalg.norm(ref)
    assert float(rel_err) < 2e-2, f"relative error too high: {float(rel_err)}"

    print("KERNEL_OK")
</pallas_src>

<mosaic_0001>
module attributes {stable_mosaic.version = 11 : i64} {
  func.func @_conv_bn_relu_kernel(%arg0: i32, %arg1: i32, %arg2: memref<1x34x16x48xbf16, #tpu.memory_space<vmem>>, %arg3: memref<256x128xbf16, #tpu.memory_space<vmem>>, %arg4: memref<2x128xf32, #tpu.memory_space<vmem>>, %arg5: memref<1x32x16x128xbf16, #tpu.memory_space<vmem>>) attributes {dimension_semantics = [#tpu.dimension_semantics<parallel>, #tpu.dimension_semantics<parallel>], iteration_bounds = array<i64: 2, 1>, scalar_prefetch = 0 : i64, scratch_operands = 0 : i64, tpu.core_type = #tpu.core_type<tc>, window_params = [{transform_indices = @transform_0, window_bounds = array<i64: 1, 34, 16, 48>}, {pipeline_mode = #tpu.pipeline_mode<synchronous>, transform_indices = @transform_1, window_bounds = array<i64: 256, 128>}, {pipeline_mode = #tpu.pipeline_mode<synchronous>, transform_indices = @transform_2, window_bounds = array<i64: 2, 128>}, {transform_indices = @transform_3, window_bounds = array<i64: 1, 32, 16, 128>}]} {
    %c32_i32 = arith.constant 32 : i32
    %0 = arith.muli %arg1, %c32_i32 : i32
    %1 = tpu.assume_multiple %0, 32 : i32
    %c0_i32 = arith.constant 0 : i32
    %2 = arith.addi %1, %c0_i32 : i32
    %c0 = arith.constant 0 : index
    %3 = arith.index_cast %2 : i32 to index
    %c0_0 = arith.constant 0 : index
    %c0_1 = arith.constant 0 : index
    %4 = vector.load %arg2[%c0, %3, %c0_0, %c0_1] : memref<1x34x16x48xbf16, #tpu.memory_space<vmem>>, vector<1x32x16x48xbf16>
    %5 = vector.shape_cast %4 : vector<1x32x16x48xbf16> to vector<32x16x48xbf16>
    %6 = vector.extract_strided_slice %5 {offsets = [0, 0, 0], sizes = [32, 16, 24], strides = [1, 1, 1]} : vector<32x16x48xbf16> to vector<32x16x24xbf16>
    %7 = vector.extract_strided_slice %5 {offsets = [0, 0, 24], sizes = [32, 16, 24], strides = [1, 1, 1]} : vector<32x16x48xbf16> to vector<32x16x24xbf16>
    %c1_i32 = arith.constant 1 : i32
    %8 = arith.addi %1, %c1_i32 : i32
    %c0_2 = arith.constant 0 : index
    %9 = arith.index_cast %8 : i32 to index
    %c0_3 = arith.constant 0 : index
    %c0_4 = arith.constant 0 : index
    %10 = vector.load %arg2[%c0_2, %9, %c0_3, %c0_4] : memref<1x34x16x48xbf16, #tpu.memory_space<vmem>>, vector<1x32x16x48xbf16>
    %11 = vector.shape_cast %10 : vector<1x32x16x48xbf16> to vector<32x16x48xbf16>
    %12 = vector.extract_strided_slice %11 {offsets = [0, 0, 0], sizes = [32, 16, 24], strides = [1, 1, 1]} : vector<32x16x48xbf16> to vector<32x16x24xbf16>
    %13 = vector.extract_strided_slice %11 {offsets = [0, 0, 24], sizes = [32, 16, 24], strides = [1, 1, 1]} : vector<32x16x48xbf16> to vector<32x16x24xbf16>
    %c2_i32 = arith.constant 2 : i32
    %14 = arith.addi %1, %c2_i32 : i32
    %c0_5 = arith.constant 0 : index
    %15 = arith.index_cast %14 : i32 to index
    %c0_6 = arith.constant 0 : index
    %c0_7 = arith.constant 0 : index
    %16 = vector.load %arg2[%c0_5, %15, %c0_6, %c0_7] : memref<1x34x16x48xbf16, #tpu.memory_space<vmem>>, vector<1x32x16x48xbf16>
    %17 = vector.shape_cast %16 : vector<1x32x16x48xbf16> to vector<32x16x48xbf16>
    %18 = vector.extract_strided_slice %17 {offsets = [0, 0, 0], sizes = [32, 16, 24], strides = [1, 1, 1]} : vector<32x16x48xbf16> to vector<32x16x24xbf16>
    %19 = vector.extract_strided_slice %17 {offsets = [0, 0, 24], sizes = [32, 16, 24], strides = [1, 1, 1]} : vector<32x16x48xbf16> to vector<32x16x24xbf16>
    %cst = arith.constant 0.000000e+00 : bf16
    %20 = vector.broadcast %cst : bf16 to vector<32x16x56xbf16>
    %21 = tpu.concatenate %6, %12, %18, %20, %7, %13, %19, %20 in 2 : vector<32x16x24xbf16>, vector<32x16x24xbf16>, vector<32x16x24xbf16>, vector<32x16x56xbf16>, vector<32x16x24xbf16>, vector<32x16x24xbf16>, vector<32x16x24xbf16>, vector<32x16x56xbf16> -> vector<32x16x256xbf16>
    %22 = vector.shape_cast %21 : vector<32x16x256xbf16> to vector<512x256xbf16>
    %c0_8 = arith.constant 0 : index
    %c0_9 = arith.constant 0 : index
    %23 = vector.load %arg3[%c0_8, %c0_9] : memref<256x128xbf16, #tpu.memory_space<vmem>>, vector<256x128xbf16>
    %cst_10 = arith.constant dense<0.000000e+00> : vector<512x128xf32>
    %24 = tpu.matmul %22, %23, %cst_10 {dimension_numbers = #tpu.dot_dimension_numbers<[1], [0], [0], [1], [0, 0, 1, 1], [], []>} : vector<512x256xbf16>, vector<256x128xbf16>, vector<512x128xf32> -> vector<512x128xf32>
    %c0_11 = arith.constant 0 : index
    %c0_12 = arith.constant 0 : index
    %25 = vector.load %arg4[%c0_11, %c0_12] : memref<2x128xf32, #tpu.memory_space<vmem>>, vector<2x128xf32>
    %26 = vector.extract_strided_slice %25 {offsets = [0, 0], sizes = [1, 128], strides = [1, 1]} : vector<2x128xf32> to vector<1x128xf32>
    %27 = vector.broadcast %26 : vector<1x128xf32> to vector<512x128xf32>
    %28 = arith.mulf %24, %27 : vector<512x128xf32>
    %29 = vector.extract_strided_slice %25 {offsets = [1, 0], sizes = [1, 128], strides = [1, 1]} : vector<2x128xf32> to vector<1x128xf32>
    %30 = vector.broadcast %29 : vector<1x128xf32> to vector<512x128xf32>
    %31 = arith.addf %28, %30 : vector<512x128xf32>
    %cst_13 = arith.constant 0.000000e+00 : f32
    %32 = vector.broadcast %cst_13 : f32 to vector<512x128xf32>
    %33 = arith.maximumf %31, %32 : vector<512x128xf32>
    %34 = arith.truncf %33 : vector<512x128xf32> to vector<512x128xbf16>
    %35 = vector.shape_cast %34 : vector<512x128xbf16> to vector<32x16x128xbf16>
    %c0_14 = arith.constant 0 : index
    %c0_15 = arith.constant 0 : index
    %c0_16 = arith.constant 0 : index
    %c0_17 = arith.constant 0 : index
    %36 = vector.load %arg5[%c0_14, %c0_15, %c0_16, %c0_17] : memref<1x32x16x128xbf16, #tpu.memory_space<vmem>>, vector<1x32x16x128xbf16>
    %37 = vector.shape_cast %36 : vector<1x32x16x128xbf16> to vector<32x16x128xbf16>
    %38 = vector.shape_cast %35 : vector<32x16x128xbf16> to vector<1x32x16x128xbf16>
    tpu.vector_store %arg5[%c0_14, %c0_15, %c0_16, %c0_17], %38 {strides = array<i32>} : memref<1x32x16x128xbf16, #tpu.memory_space<vmem>>, vector<1x32x16x128xbf16>,
    return
  }
  func.func @transform_0(%arg0: i32, %arg1: i32) -> (i32, i32, i32, i32) {
    %c0_i32 = arith.constant 0 : i32
    %c0_i32_0 = arith.constant 0 : i32
    %c0_i32_1 = arith.constant 0 : i32
    %c0_i32_2 = arith.constant 0 : i32
    return %arg0, %c0_i32, %c0_i32_0, %c0_i32_1 : i32, i32, i32, i32
  }
  func.func @transform_1(%arg0: i32, %arg1: i32) -> (i32, i32) {
    %c0_i32 = arith.constant 0 : i32
    %c0_i32_0 = arith.constant 0 : i32
    %c0_i32_1 = arith.constant 0 : i32
    return %c0_i32, %c0_i32_0 : i32, i32
  }
  func.func @transform_2(%arg0: i32, %arg1: i32) -> (i32, i32) {
    %c0_i32 = arith.constant 0 : i32
    %c0_i32_0 = arith.constant 0 : i32
    %c0_i32_1 = arith.constant 0 : i32
    return %c0_i32, %c0_i32_0 : i32, i32
  }
  func.func @transform_3(%arg0: i32, %arg1: i32) -> (i32, i32, i32, i32) {
    %c0_i32 = arith.constant 0 : i32
    %c0_i32_0 = arith.constant 0 : i32
    %c0_i32_1 = arith.constant 0 : i32
    return %arg0, %arg1, %c0_i32, %c0_i32_0 : i32, i32, i32, i32
  }
}

</mosaic_0001>

<llo_original>
// kernel: res_input_layer_fwd.1
$region0: #{res_input_layer_fwd.1}
  #allocation0 [shape = 'u32[]', space=smem, size = 0x4, offset = 0x4, fixed_abs, tag = 'smem constant byte address 0x4 - core index']
  #allocation1 [shape = 'u32[144,128]{1,0:T(1,128)}', space=vmem, size = 0x12000, scoped, tag = 'internal scratch']
  %s0 = inlined_call_operand.vmem [shape: bf16[2,34,16,48], index: 0, kind: input, shape index: {}]
  %s1 = inlined_call_operand.vmem [shape: bf16[256,128], index: 1, kind: input, shape index: {}]
  %s2 = inlined_call_operand.vmem [shape: f32[2,128], index: 2, kind: input, shape index: {}]
  %s3 = inlined_call_operand.vmem [shape: bf16[2,32,16,128], index: 3, kind: output, shape index: {}]
  %s4 = sld [smem:[#allocation0]]
  $region45: #{res_input_layer_fwd.1} parent=0
    _
  %s6 = ssub.s32 1, %s4
  %s7 = scalar_select 0, %s6, %s4
  loop: start=0, step=1, limit=4
  $region2: #{res_input_layer_fwd.1} parent=0 // loop_pre_header
    _
  $region3: #{res_input_layer_fwd.1} parent=0 // loop_header
    %s9 = sphi 0, %s13
    %p10 = scmp.ge.s32.totalorder %s9, 4
    %s16 = sphi 0, %s28
    %s17 = sphi 0, %s24
    %s18 = sphi 0, %s16
    %s19 = sphi 0, %s17
    %s20 = sphi 0, %s18
    %s21 = sphi 0, %s19
    %s31 = sphi 0, %s33
    %s34 = sphi 0, %s31
    %s35 = sphi 0, %s34
    %s51 = sphi 0, %s35
    %s55 = sphi 0, %s55
    %s57 = sphi 0, %s55
    %s58 = sphi 0, %s57
    %s72 = sphi 0, %s58
    %s76 = sphi 0, %s76
    %s78 = sphi 0, %s76
    %s79 = sphi 0, %s78
    %s93 = sphi 0, %s79
    %s101 = sphi 0, %s103
    %s104 = sphi 0, %s101
    %s105 = sphi 0, %s104
    %s121 = sphi 0, %s105
  $region4: #{res_input_layer_fwd.1} parent=0 // loop_header_branch
    %12 = sbr.rel (%p10) target = $region8
  $region5: #{res_input_layer_fwd.1} parent=0 // loop_body
    %s14 = ssub.s32 %s9, 1
    %s15 = ssub.s32 %s9, 2
    %s22 = sadd.s32 1, %s17
    %p23 = scmp.ge.s32.totalorder %s22, 1
    %s24 = scalar_select %p23, 0, %s22
    %s25 = sadd.s32 1, %s16
    %s26 = scalar_select %p23, %s25, %s16
    %p27 = scmp.ge.s32.totalorder %s26, 2
    %s28 = scalar_select %p27, 0, %s26
    %s29 = ssub.s32 %s16, %s28
    %p30 = scmp.eq.s32.totalorder %s29, 0
    %s32 = sadd.s32 %s31, 1
    %s33 = scalar_select %p30, %s31, %s32
    %p36 = pneg %p30
    %p37 = scmp.eq.s32.totalorder %s9, 1
    %p38 = por %p36, %p37
    %p39 = scmp.ne.s32.totalorder %s31, %s34
    %p40 = scmp.eq.s32.totalorder %s9, 0
    %p41 = por %p39, %p40
    %p42 = scmp.ne.s32.totalorder %s31, %s34
    %p43 = scmp.eq.s32.totalorder %s14, 1
    %p44 = por %p42, %p43
    %p45 = scmp.ne.s32.totalorder %s34, %s35
    %p46 = scmp.eq.s32.totalorder %s14, 0
    %p47 = por %p45, %p46
    %p48 = scmp.ne.s32.totalorder %s34, %s35
    %p49 = scmp.eq.s32.totalorder %s15, 1
    %p50 = por %p48, %p49
    %p52 = scmp.ne.s32.totalorder %s35, %s51
    %p53 = scmp.eq.s32.totalorder %s15, 0
    %p54 = por %p52, %p53
    %s56 = sadd.s32 %s55, 1
    %p59 = scmp.eq.s32.totalorder %s9, 1
    %p60 = scmp.ne.s32.totalorder %s55, %s57
    %p61 = scmp.eq.s32.totalorder %s9, 0
    %p62 = por %p60, %p61
    %p63 = scmp.ne.s32.totalorder %s55, %s57
    %p64 = scmp.eq.s32.totalorder %s14, 1
    %p65 = por %p63, %p64
    %p66 = scmp.ne.s32.totalorder %s57, %s58
    %p67 = scmp.eq.s32.totalorder %s14, 0
    %p68 = por %p66, %p67
    %p69 = scmp.ne.s32.totalorder %s57, %s58
    %p70 = scmp.eq.s32.totalorder %s15, 1
    %p71 = por %p69, %p70
    %p73 = scmp.ne.s32.totalorder %s58, %s72
    %p74 = scmp.eq.s32.totalorder %s15, 0
    %p75 = por %p73, %p74
    %s77 = sadd.s32 %s76, 1
    %p80 = scmp.eq.s32.totalorder %s9, 1
    %p81 = scmp.ne.s32.totalorder %s76, %s78
    %p82 = scmp.eq.s32.totalorder %s9, 0
    %p83 = por %p81, %p82
    %p84 = scmp.ne.s32.totalorder %s76, %s78
    %p85 = scmp.eq.s32.totalorder %s14, 1
    %p86 = por %p84, %p85
    %p87 = scmp.ne.s32.totalorder %s78, %s79
    %p88 = scmp.eq.s32.totalorder %s14, 0
    %p89 = por %p87, %p88
    %p90 = scmp.ne.s32.totalorder %s78, %s79
    %p91 = scmp.eq.s32.totalorder %s15, 1
    %p92 = por %p90, %p91
    %p94 = scmp.ne.s32.totalorder %s79, %s93
    %p95 = scmp.eq.s32.totalorder %s15, 0
    %p96 = por %p94, %p95
    %s97 = ssub.s32 %s16, %s28
    %s98 = ssub.s32 %s17, %s24
    %s99 = sor.u32 %s97, %s98
    %p100 = scmp.eq.s32.totalorder %s99, 0
    %s102 = sadd.s32 %s101, 1
    %s103 = scalar_select %p100, %s101, %s102
    %p106 = pneg %p100
    %p107 = scmp.eq.s32.totalorder %s9, 1
    %p108 = por %p106, %p107
    %p109 = scmp.ne.s32.totalorder %s101, %s104
    %p110 = scmp.eq.s32.totalorder %s9, 0
    %p111 = por %p109, %p110
    %p112 = scmp.ne.s32.totalorder %s101, %s104
    %p113 = scmp.eq.s32.totalorder %s14, 1
    %p114 = por %p112, %p113
    %p115 = scmp.ne.s32.totalorder %s104, %s105
    %p116 = scmp.eq.s32.totalorder %s14, 0
    %p117 = por %p115, %p116
    %p118 = scmp.ne.s32.totalorder %s104, %s105
    %p119 = scmp.eq.s32.totalorder %s15, 1
    %p120 = por %p118, %p119
    %p122 = scmp.ne.s32.totalorder %s105, %s121
    %p123 = scmp.eq.s32.totalorder %s15, 0
    %p124 = por %p122, %p123
    %p125 = scmp.le.s32.totalorder 1, %s9
    %p126 = scmp.lt.s32.totalorder %s9, 3
    %p127 = pnand %p125, %p126
    %p128 = pneg %p127
    // Predicated region
    $region9: #{res_input_layer_fwd.1} parent=5 // pred_check
      _
    $region10: #{res_input_layer_fwd.1} parent=5 // pred_check_branch
      %130 = sbr.rel (%p127) target = $region12
    $region11: #{res_input_layer_fwd.1} parent=5 // pred_region
      %s131 = ssub.s32 %s9, 1
      // Predicated region
      $region13: #{res_input_layer_fwd.1} parent=11 // pred_check
        %p132 = pneg %p68
      $region14: #{res_input_layer_fwd.1} parent=11 // pred_check_branch
        %134 = sbr.rel (%p132) target = $region16
      $region15: #{res_input_layer_fwd.1} parent=11 // pred_region
        _
      $region16: #{res_input_layer_fwd.1} parent=11 // pred_fallthru
        _
      // Predicated region
      $region17: #{res_input_layer_fwd.1} parent=11 // pred_check
        %p135 = pneg %p89
      $region18: #{res_input_layer_fwd.1} parent=11 // pred_check_branch
        %137 = sbr.rel (%p135) target = $region20
      $region19: #{res_input_layer_fwd.1} parent=11 // pred_region
        _
      $region20: #{res_input_layer_fwd.1} parent=11 // pred_fallthru
        _
    $region12: #{res_input_layer_fwd.1} parent=5 // pred_fallthru
      _
    %p138 = scmp.lt.s32.totalorder %s9, 2
    // Predicated region
    $region21: #{res_input_layer_fwd.1} parent=5 // pred_check
      %p139 = pneg %p138
    $region22: #{res_input_layer_fwd.1} parent=5 // pred_check_branch
      %141 = sbr.rel (%p139) target = $region24
    $region23: #{res_input_layer_fwd.1} parent=5 // pred_region
      // Predicated region
      $region25: #{res_input_layer_fwd.1} parent=23 // pred_check
        %p142 = pneg %p41
      $region26: #{res_input_layer_fwd.1} parent=23 // pred_check_branch
        %144 = sbr.rel (%p142) target = $region28
      $region27: #{res_input_layer_fwd.1} parent=23 // pred_region
        %p145 = scmp.lt.s32.totalorder %s16, 1
        %s146 = scalar_select %p145, %s16, 1
        %s147 = smul.addr %s146, 68
        %s148 = smul.addr %s147, 4
        %s149 = scalar_lea.vmem %s0, %s148
      $region28: #{res_input_layer_fwd.1} parent=23 // pred_fallthru
        _
    $region24: #{res_input_layer_fwd.1} parent=5 // pred_fallthru
      _
    %p150 = scmp.le.s32.totalorder 1, %s9
    %p151 = scmp.lt.s32.totalorder %s9, 3
    %p152 = pnand %p150, %p151
    %p153 = pneg %p152
    // Predicated region
    $region29: #{res_input_layer_fwd.1} parent=5 // pred_check
      _
    $region30: #{res_input_layer_fwd.1} parent=5 // pred_check_branch
      %155 = sbr.rel (%p152) target = $region32
    $region31: #{res_input_layer_fwd.1} parent=5 // pred_region
      %s156 = ssub.s32 %s9, 1
      %p157 = scmp.lt.s32.totalorder %s18, 1
      %s158 = scalar_select %p157, %s18, 1
      %s159 = smul.addr %s158, 68
      %s160 = smul.addr %s159, 4
      %s161 = scalar_lea.vmem %s0, %s160
      %p162 = pneg %p47
      %p163 = pneg %p44
      %p164 = pneg %p68
      %p165 = pneg %p65
      %p166 = pneg %p89
      %p167 = pneg %p86
      %p168 = pneg %p117
      %p169 = pneg %p114
      %s170 = smul.u32 32, %s19
      %p171 = scmp.lt.s32.totalorder %s18, 1
      %s172 = scalar_select %p171, %s18, 1
      %p173 = scmp.lt.s32.totalorder %s170, 31
      %s174 = scalar_select %p173, %s170, 31
      %s175 = smul.addr %s174, 2
      %s176 = smul.addr %s172, 64
      %s177 = sadd.s32 %s175, %s176
      %s178 = smul.addr %s177, 4
      %s179 = scalar_lea.vmem %s3, %s178
      %p180 = scmp.lt.s32.totalorder %s18, 1
      %s181 = scalar_select %p180, %s18, 1
      %s182 = smul.addr %s181, 68
      %s183 = smul.addr %s182, 4
      %s184 = scalar_lea.vmem %s0, %s183
      %s185 = smul.u32 32, %s19
      %p186 = scmp.lt.s32.totalorder %s18, 1
      %s187 = scalar_select %p186, %s18, 1
      %p188 = scmp.lt.s32.totalorder %s185, 31
      %s189 = scalar_select %p188, %s185, 31
      %s190 = smul.addr %s189, 2
      %s191 = smul.addr %s187, 64
      %s192 = sadd.s32 %s190, %s191
      %s193 = smul.addr %s192, 4
      %s194 = scalar_lea.vmem %s3, %s193
      %s195 = smul.u32 32, %s19
      %s197 = smul.u32 %s19, 32
      %s198 = smul.u32 %s197, 2
      %s199 = smul.addr %s198, 4
      %s200 = scalar_lea.vmem %s184, %s199
      %v201 = vld [vmem:[%s200] sm:$0xf]
      %v202 = vld [vmem:[%s200 + $0x4] sm:$0xf]
      %v203 = vld [vmem:[%s200 + $0x8] sm:$0xf]
      %v204 = vld [vmem:[%s200 + $0xc] sm:$0xf]
      %v205 = vld [vmem:[%s200 + $0x10] sm:$0xf]
      %v206 = vld [vmem:[%s200 + $0x14] sm:$0xf]
      %v207 = vld [vmem:[%s200 + $0x18] sm:$0xf]
      %v208 = vld [vmem:[%s200 + $0x1c] sm:$0xf]
      %v209 = vld [vmem:[%s200 + $0x20] sm:$0xf]
      %v210 = vld [vmem:[%s200 + $0x24] sm:$0xf]
      %v211 = vld [vmem:[%s200 + $0x28] sm:$0xf]
      %v212 = vld [vmem:[%s200 + $0x2c] sm:$0xf]
      %v213 = vld [vmem:[%s200 + $0x30] sm:$0xf]
      %v214 = vld [vmem:[%s200 + $0x34] sm:$0xf]
      %v215 = vld [vmem:[%s200 + $0x38] sm:$0xf]
      %v216 = vld [vmem:[%s200 + $0x3c] sm:$0xf]
      %v217 = vld [vmem:[%s200 + $0x40] sm:$0xf]
      %v218 = vld [vmem:[%s200 + $0x44] sm:$0xf]
      %v219 = vld [vmem:[%s200 + $0x48] sm:$0xf]
      %v220 = vld [vmem:[%s200 + $0x4c] sm:$0xf]
      %v221 = vld [vmem:[%s200 + $0x50] sm:$0xf]
      %v222 = vld [vmem:[%s200 + $0x54] sm:$0xf]
      %v223 = vld [vmem:[%s200 + $0x58] sm:$0xf]
      %v224 = vld [vmem:[%s200 + $0x5c] sm:$0xf]
      %v225 = vld [vmem:[%s200 + $0x60] sm:$0xf]
      %v226 = vld [vmem:[%s200 + $0x64] sm:$0xf]
      %v227 = vld [vmem:[%s200 + $0x68] sm:$0xf]
      %v228 = vld [vmem:[%s200 + $0x6c] sm:$0xf]
      %v229 = vld [vmem:[%s200 + $0x70] sm:$0xf]
      %v230 = vld [vmem:[%s200 + $0x74] sm:$0xf]
      %v231 = vld [vmem:[%s200 + $0x78] sm:$0xf]
      %v232 = vld [vmem:[%s200 + $0x7c] sm:$0xf]
      %v233 = vld [vmem:[%s200 + $0x80] sm:$0xf]
      %v234 = vld [vmem:[%s200 + $0x84] sm:$0xf]
      %v235 = vld [vmem:[%s200 + $0x88] sm:$0xf]
      %v236 = vld [vmem:[%s200 + $0x8c] sm:$0xf]
      %v237 = vld [vmem:[%s200 + $0x90] sm:$0xf]
      %v238 = vld [vmem:[%s200 + $0x94] sm:$0xf]
      %v239 = vld [vmem:[%s200 + $0x98] sm:$0xf]
      %v240 = vld [vmem:[%s200 + $0x9c] sm:$0xf]
      %v241 = vld [vmem:[%s200 + $0xa0] sm:$0xf]
      %v242 = vld [vmem:[%s200 + $0xa4] sm:$0xf]
      %v243 = vld [vmem:[%s200 + $0xa8] sm:$0xf]
      %v244 = vld [vmem:[%s200 + $0xac] sm:$0xf]
      %v245 = vld [vmem:[%s200 + $0xb0] sm:$0xf]
      %v246 = vld [vmem:[%s200 + $0xb4] sm:$0xf]
      %v247 = vld [vmem:[%s200 + $0xb8] sm:$0xf]
      %v248 = vld [vmem:[%s200 + $0xbc] sm:$0xf]
      %v249 = vld [vmem:[%s200 + $0xc0] sm:$0xf]
      %v250 = vld [vmem:[%s200 + $0xc4] sm:$0xf]
      %v251 = vld [vmem:[%s200 + $0xc8] sm:$0xf]
      %v252 = vld [vmem:[%s200 + $0xcc] sm:$0xf]
      %v253 = vld [vmem:[%s200 + $0xd0] sm:$0xf]
      %v254 = vld [vmem:[%s200 + $0xd4] sm:$0xf]
      %v255 = vld [vmem:[%s200 + $0xd8] sm:$0xf]
      %v256 = vld [vmem:[%s200 + $0xdc] sm:$0xf]
      %v257 = vld [vmem:[%s200 + $0xe0] sm:$0xf]
      %v258 = vld [vmem:[%s200 + $0xe4] sm:$0xf]
      %v259 = vld [vmem:[%s200 + $0xe8] sm:$0xf]
      %v260 = vld [vmem:[%s200 + $0xec] sm:$0xf]
      %v261 = vld [vmem:[%s200 + $0xf0] sm:$0xf]
      %v262 = vld [vmem:[%s200 + $0xf4] sm:$0xf]
      %v263 = vld [vmem:[%s200 + $0xf8] sm:$0xf]
      %v264 = vld [vmem:[%s200 + $0xfc] sm:$0xf]
      %s265 = sadd.s32 %s197, 1
      %s266 = smul.u32 %s265, 2
      %s267 = smul.addr %s266, 4
      %s268 = scalar_lea.vmem %s184, %s267
      %v269 = vld [vmem:[%s268] sm:$0xf]
      %v270 = vld [vmem:[%s268 + $0x4] sm:$0xf]
      %v271 = vld [vmem:[%s268 + $0x8] sm:$0xf]
      %v272 = vld [vmem:[%s268 + $0xc] sm:$0xf]
      %v273 = vld [vmem:[%s268 + $0x10] sm:$0xf]
      %v274 = vld [vmem:[%s268 + $0x14] sm:$0xf]
      %v275 = vld [vmem:[%s268 + $0x18] sm:$0xf]
      %v276 = vld [vmem:[%s268 + $0x1c] sm:$0xf]
      %v277 = vld [vmem:[%s268 + $0x20] sm:$0xf]
      %v278 = vld [vmem:[%s268 + $0x24] sm:$0xf]
      %v279 = vld [vmem:[%s268 + $0x28] sm:$0xf]
      %v280 = vld [vmem:[%s268 + $0x2c] sm:$0xf]
      %v281 = vld [vmem:[%s268 + $0x30] sm:$0xf]
      %v282 = vld [vmem:[%s268 + $0x34] sm:$0xf]
      %v283 = vld [vmem:[%s268 + $0x38] sm:$0xf]
      %v284 = vld [vmem:[%s268 + $0x3c] sm:$0xf]
      %v285 = vld [vmem:[%s268 + $0x40] sm:$0xf]
      %v286 = vld [vmem:[%s268 + $0x44] sm:$0xf]
      %v287 = vld [vmem:[%s268 + $0x48] sm:$0xf]
      %v288 = vld [vmem:[%s268 + $0x4c] sm:$0xf]
      %v289 = vld [vmem:[%s268 + $0x50] sm:$0xf]
      %v290 = vld [vmem:[%s268 + $0x54] sm:$0xf]
      %v291 = vld [vmem:[%s268 + $0x58] sm:$0xf]
      %v292 = vld [vmem:[%s268 + $0x5c] sm:$0xf]
      %v293 = vld [vmem:[%s268 + $0x60] sm:$0xf]
      %v294 = vld [vmem:[%s268 + $0x64] sm:$0xf]
      %v295 = vld [vmem:[%s268 + $0x68] sm:$0xf]
      %v296 = vld [vmem:[%s268 + $0x6c] sm:$0xf]
      %v297 = vld [vmem:[%s268 + $0x70] sm:$0xf]
      %v298 = vld [vmem:[%s268 + $0x74] sm:$0xf]
      %v299 = vld [vmem:[%s268 + $0x78] sm:$0xf]
      %v300 = vld [vmem:[%s268 + $0x7c] sm:$0xf]
      %v301 = vld [vmem:[%s268 + $0x80] sm:$0xf]
      %v302 = vld [vmem:[%s268 + $0x84] sm:$0xf]
      %v303 = vld [vmem:[%s268 + $0x88] sm:$0xf]
      %v304 = vld [vmem:[%s268 + $0x8c] sm:$0xf]
      %v305 = vld [vmem:[%s268 + $0x90] sm:$0xf]
      %v306 = vld [vmem:[%s268 + $0x94] sm:$0xf]
      %v307 = vld [vmem:[%s268 + $0x98] sm:$0xf]
      %v308 = vld [vmem:[%s268 + $0x9c] sm:$0xf]
      %v309 = vld [vmem:[%s268 + $0xa0] sm:$0xf]
      %v310 = vld [vmem:[%s268 + $0xa4] sm:$0xf]
      %v311 = vld [vmem:[%s268 + $0xa8] sm:$0xf]
      %v312 = vld [vmem:[%s268 + $0xac] sm:$0xf]
      %v313 = vld [vmem:[%s268 + $0xb0] sm:$0xf]
      %v314 = vld [vmem:[%s268 + $0xb4] sm:$0xf]
      %v315 = vld [vmem:[%s268 + $0xb8] sm:$0xf]
      %v316 = vld [vmem:[%s268 + $0xbc] sm:$0xf]
      %v317 = vld [vmem:[%s268 + $0xc0] sm:$0xf]
      %v318 = vld [vmem:[%s268 + $0xc4] sm:$0xf]
      %v319 = vld [vmem:[%s268 + $0xc8] sm:$0xf]
      %v320 = vld [vmem:[%s268 + $0xcc] sm:$0xf]
      %v321 = vld [vmem:[%s268 + $0xd0] sm:$0xf]
      %v322 = vld [vmem:[%s268 + $0xd4] sm:$0xf]
      %v323 = vld [vmem:[%s268 + $0xd8] sm:$0xf]
      %v324 = vld [vmem:[%s268 + $0xdc] sm:$0xf]
      %v325 = vld [vmem:[%s268 + $0xe0] sm:$0xf]
      %v326 = vld [vmem:[%s268 + $0xe4] sm:$0xf]
      %v327 = vld [vmem:[%s268 + $0xe8] sm:$0xf]
      %v328 = vld [vmem:[%s268 + $0xec] sm:$0xf]
      %v329 = vld [vmem:[%s268 + $0xf0] sm:$0xf]
      %v330 = vld [vmem:[%s268 + $0xf4] sm:$0xf]
      %v331 = vld [vmem:[%s268 + $0xf8] sm:$0xf]
      %v332 = vld [vmem:[%s268 + $0xfc] sm:$0xf]
      %s333 = sadd.s32 %s197, 2
      %s334 = smul.u32 %s333, 2
      %s335 = smul.addr %s334, 4
      %s336 = scalar_lea.vmem %s184, %s335
      %v337 = vld [vmem:[%s336] sm:$0xf]
      %v338 = vld [vmem:[%s336 + $0x4] sm:$0xf]
      %v339 = vld [vmem:[%s336 + $0x8] sm:$0xf]
      %v340 = vld [vmem:[%s336 + $0xc] sm:$0xf]
      %v341 = vld [vmem:[%s336 + $0x10] sm:$0xf]
      %v342 = vld [vmem:[%s336 + $0x14] sm:$0xf]
      %v343 = vld [vmem:[%s336 + $0x18] sm:$0xf]
      %v344 = vld [vmem:[%s336 + $0x1c] sm:$0xf]
      %v345 = vld [vmem:[%s336 + $0x20] sm:$0xf]
      %v346 = vld [vmem:[%s336 + $0x24] sm:$0xf]
      %v347 = vld [vmem:[%s336 + $0x28] sm:$0xf]
      %v348 = vld [vmem:[%s336 + $0x2c] sm:$0xf]
      %v349 = vld [vmem:[%s336 + $0x30] sm:$0xf]
      %v350 = vld [vmem:[%s336 + $0x34] sm:$0xf]
      %v351 = vld [vmem:[%s336 + $0x38] sm:$0xf]
      %v352 = vld [vmem:[%s336 + $0x3c] sm:$0xf]
      %v353 = vld [vmem:[%s336 + $0x40] sm:$0xf]
      %v354 = vld [vmem:[%s336 + $0x44] sm:$0xf]
      %v355 = vld [vmem:[%s336 + $0x48] sm:$0xf]
      %v356 = vld [vmem:[%s336 + $0x4c] sm:$0xf]
      %v357 = vld [vmem:[%s336 + $0x50] sm:$0xf]
      %v358 = vld [vmem:[%s336 + $0x54] sm:$0xf]
      %v359 = vld [vmem:[%s336 + $0x58] sm:$0xf]
      %v360 = vld [vmem:[%s336 + $0x5c] sm:$0xf]
      %v361 = vld [vmem:[%s336 + $0x60] sm:$0xf]
      %v362 = vld [vmem:[%s336 + $0x64] sm:$0xf]
      %v363 = vld [vmem:[%s336 + $0x68] sm:$0xf]
      %v364 = vld [vmem:[%s336 + $0x6c] sm:$0xf]
      %v365 = vld [vmem:[%s336 + $0x70] sm:$0xf]
      %v366 = vld [vmem:[%s336 + $0x74] sm:$0xf]
      %v367 = vld [vmem:[%s336 + $0x78] sm:$0xf]
      %v368 = vld [vmem:[%s336 + $0x7c] sm:$0xf]
      %v369 = vld [vmem:[%s336 + $0x80] sm:$0xf]
      %v370 = vld [vmem:[%s336 + $0x84] sm:$0xf]
      %v371 = vld [vmem:[%s336 + $0x88] sm:$0xf]
      %v372 = vld [vmem:[%s336 + $0x8c] sm:$0xf]
      %v373 = vld [vmem:[%s336 + $0x90] sm:$0xf]
      %v374 = vld [vmem:[%s336 + $0x94] sm:$0xf]
      %v375 = vld [vmem:[%s336 + $0x98] sm:$0xf]
      %v376 = vld [vmem:[%s336 + $0x9c] sm:$0xf]
      %v377 = vld [vmem:[%s336 + $0xa0] sm:$0xf]
      %v378 = vld [vmem:[%s336 + $0xa4] sm:$0xf]
      %v379 = vld [vmem:[%s336 + $0xa8] sm:$0xf]
      %v380 = vld [vmem:[%s336 + $0xac] sm:$0xf]
      %v381 = vld [vmem:[%s336 + $0xb0] sm:$0xf]
      %v382 = vld [vmem:[%s336 + $0xb4] sm:$0xf]
      %v383 = vld [vmem:[%s336 + $0xb8] sm:$0xf]
      %v384 = vld [vmem:[%s336 + $0xbc] sm:$0xf]
      %v385 = vld [vmem:[%s336 + $0xc0] sm:$0xf]
      %v386 = vld [vmem:[%s336 + $0xc4] sm:$0xf]
      %v387 = vld [vmem:[%s336 + $0xc8] sm:$0xf]
      %v388 = vld [vmem:[%s336 + $0xcc] sm:$0xf]
      %v389 = vld [vmem:[%s336 + $0xd0] sm:$0xf]
      %v390 = vld [vmem:[%s336 + $0xd4] sm:$0xf]
      %v391 = vld [vmem:[%s336 + $0xd8] sm:$0xf]
      %v392 = vld [vmem:[%s336 + $0xdc] sm:$0xf]
      %v393 = vld [vmem:[%s336 + $0xe0] sm:$0xf]
      %v394 = vld [vmem:[%s336 + $0xe4] sm:$0xf]
      %v395 = vld [vmem:[%s336 + $0xe8] sm:$0xf]
      %v396 = vld [vmem:[%s336 + $0xec] sm:$0xf]
      %v397 = vld [vmem:[%s336 + $0xf0] sm:$0xf]
      %v398 = vld [vmem:[%s336 + $0xf4] sm:$0xf]
      %v399 = vld [vmem:[%s336 + $0xf8] sm:$0xf]
      %v400 = vld [vmem:[%s336 + $0xfc] sm:$0xf]
      %v465 = vunpack.c.l.b16 %v201
      %v466 = vunpack.c.l.b16 %v202
      %v467 = vunpack.c.l.b16 %v203
      %v468 = vunpack.c.l.b16 %v204
      %v469 = vunpack.c.l.b16 %v205
      %v470 = vunpack.c.l.b16 %v206
      %v471 = vunpack.c.l.b16 %v207
      %v472 = vunpack.c.l.b16 %v208
      %v473 = vunpack.c.l.b16 %v209
      %v474 = vunpack.c.l.b16 %v210
      %v475 = vunpack.c.l.b16 %v211
      %v476 = vunpack.c.l.b16 %v212
      %v477 = vunpack.c.l.b16 %v213
      %v478 = vunpack.c.l.b16 %v214
      %v479 = vunpack.c.l.b16 %v215
      %v480 = vunpack.c.l.b16 %v216
      %v481 = vunpack.c.l.b16 %v217
      %v482 = vunpack.c.l.b16 %v218
      %v483 = vunpack.c.l.b16 %v219
      %v484 = vunpack.c.l.b16 %v220
      %v485 = vunpack.c.l.b16 %v221
      %v486 = vunpack.c.l.b16 %v222
      %v487 = vunpack.c.l.b16 %v223
      %v488 = vunpack.c.l.b16 %v224
      %v489 = vunpack.c.l.b16 %v225
      %v490 = vunpack.c.l.b16 %v226
      %v491 = vunpack.c.l.b16 %v227
      %v492 = vunpack.c.l.b16 %v228
      %v493 = vunpack.c.l.b16 %v229
      %v494 = vunpack.c.l.b16 %v230
      %v495 = vunpack.c.l.b16 %v231
      %v496 = vunpack.c.l.b16 %v232
      %v497 = vunpack.c.l.b16 %v233
      %v498 = vunpack.c.l.b16 %v234
      %v499 = vunpack.c.l.b16 %v235
      %v500 = vunpack.c.l.b16 %v236
      %v501 = vunpack.c.l.b16 %v237
      %v502 = vunpack.c.l.b16 %v238
      %v503 = vunpack.c.l.b16 %v239
      %v504 = vunpack.c.l.b16 %v240
      %v505 = vunpack.c.l.b16 %v241
      %v506 = vunpack.c.l.b16 %v242
      %v507 = vunpack.c.l.b16 %v243
      %v508 = vunpack.c.l.b16 %v244
      %v509 = vunpack.c.l.b16 %v245
      %v510 = vunpack.c.l.b16 %v246
      %v511 = vunpack.c.l.b16 %v247
      %v512 = vunpack.c.l.b16 %v248
      %v513 = vunpack.c.l.b16 %v249
      %v514 = vunpack.c.l.b16 %v250
      %v515 = vunpack.c.l.b16 %v251
      %v516 = vunpack.c.l.b16 %v252
      %v517 = vunpack.c.l.b16 %v253
      %v518 = vunpack.c.l.b16 %v254
      %v519 = vunpack.c.l.b16 %v255
      %v520 = vunpack.c.l.b16 %v256
      %v521 = vunpack.c.l.b16 %v257
      %v522 = vunpack.c.l.b16 %v258
      %v523 = vunpack.c.l.b16 %v259
      %v524 = vunpack.c.l.b16 %v260
      %v525 = vunpack.c.l.b16 %v261
      %v526 = vunpack.c.l.b16 %v262
      %v527 = vunpack.c.l.b16 %v263
      %v528 = vunpack.c.l.b16 %v264
      %v529 = vpack.c.b16 %v466, %v465
      %v530 = vpack.c.b16 %v468, %v467
      %v531 = vpack.c.b16 %v470, %v469
      %v532 = vpack.c.b16 %v472, %v471
      %v533 = vpack.c.b16 %v474, %v473
      %v534 = vpack.c.b16 %v476, %v475
      %v535 = vpack.c.b16 %v478, %v477
      %v536 = vpack.c.b16 %v480, %v479
      %v537 = vpack.c.b16 %v482, %v481
      %v538 = vpack.c.b16 %v484, %v483
      %v539 = vpack.c.b16 %v486, %v485
      %v540 = vpack.c.b16 %v488, %v487
      %v541 = vpack.c.b16 %v490, %v489
      %v542 = vpack.c.b16 %v492, %v491
      %v543 = vpack.c.b16 %v494, %v493
      %v544 = vpack.c.b16 %v496, %v495
      %v545 = vpack.c.b16 %v498, %v497
      %v546 = vpack.c.b16 %v500, %v499
      %v547 = vpack.c.b16 %v502, %v501
      %v548 = vpack.c.b16 %v504, %v503
      %v549 = vpack.c.b16 %v506, %v505
      %v550 = vpack.c.b16 %v508, %v507
      %v551 = vpack.c.b16 %v510, %v509
      %v552 = vpack.c.b16 %v512, %v511
      %v553 = vpack.c.b16 %v514, %v513
      %v554 = vpack.c.b16 %v516, %v515
      %v555 = vpack.c.b16 %v518, %v517
      %v556 = vpack.c.b16 %v520, %v519
      %v557 = vpack.c.b16 %v522, %v521
      %v558 = vpack.c.b16 %v524, %v523
      %v559 = vpack.c.b16 %v526, %v525
      %v560 = vpack.c.b16 %v528, %v527
      %v625 = vunpack.c.l.b16 %v269
      %v626 = vunpack.c.l.b16 %v270
      %v627 = vunpack.c.l.b16 %v271
      %v628 = vunpack.c.l.b16 %v272
      %v629 = vunpack.c.l.b16 %v273
      %v630 = vunpack.c.l.b16 %v274
      %v631 = vunpack.c.l.b16 %v275
      %v632 = vunpack.c.l.b16 %v276
      %v633 = vunpack.c.l.b16 %v277
      %v634 = vunpack.c.l.b16 %v278
      %v635 = vunpack.c.l.b16 %v279
      %v636 = vunpack.c.l.b16 %v280
      %v637 = vunpack.c.l.b16 %v281
      %v638 = vunpack.c.l.b16 %v282
      %v639 = vunpack.c.l.b16 %v283
      %v640 = vunpack.c.l.b16 %v284
      %v641 = vunpack.c.l.b16 %v285
      %v642 = vunpack.c.l.b16 %v286
      %v643 = vunpack.c.l.b16 %v287
      %v644 = vunpack.c.l.b16 %v288
      %v645 = vunpack.c.l.b16 %v289
      %v646 = vunpack.c.l.b16 %v290
      %v647 = vunpack.c.l.b16 %v291
      %v648 = vunpack.c.l.b16 %v292
      %v649 = vunpack.c.l.b16 %v293
      %v650 = vunpack.c.l.b16 %v294
      %v651 = vunpack.c.l.b16 %v295
      %v652 = vunpack.c.l.b16 %v296
      %v653 = vunpack.c.l.b16 %v297
      %v654 = vunpack.c.l.b16 %v298
      %v655 = vunpack.c.l.b16 %v299
      %v656 = vunpack.c.l.b16 %v300
      %v657 = vunpack.c.l.b16 %v301
      %v658 = vunpack.c.l.b16 %v302
      %v659 = vunpack.c.l.b16 %v303
      %v660 = vunpack.c.l.b16 %v304
      %v661 = vunpack.c.l.b16 %v305
      %v662 = vunpack.c.l.b16 %v306
      %v663 = vunpack.c.l.b16 %v307
      %v664 = vunpack.c.l.b16 %v308
      %v665 = vunpack.c.l.b16 %v309
      %v666 = vunpack.c.l.b16 %v310
      %v667 = vunpack.c.l.b16 %v311
      %v668 = vunpack.c.l.b16 %v312
      %v669 = vunpack.c.l.b16 %v313
      %v670 = vunpack.c.l.b16 %v314
      %v671 = vunpack.c.l.b16 %v315
      %v672 = vunpack.c.l.b16 %v316
      %v673 = vunpack.c.l.b16 %v317
      %v674 = vunpack.c.l.b16 %v318
      %v675 = vunpack.c.l.b16 %v319
      %v676 = vunpack.c.l.b16 %v320
      %v677 = vunpack.c.l.b16 %v321
      %v678 = vunpack.c.l.b16 %v322
      %v679 = vunpack.c.l.b16 %v323
      %v680 = vunpack.c.l.b16 %v324
      %v681 = vunpack.c.l.b16 %v325
      %v682 = vunpack.c.l.b16 %v326
      %v683 = vunpack.c.l.b16 %v327
      %v684 = vunpack.c.l.b16 %v328
      %v685 = vunpack.c.l.b16 %v329
      %v686 = vunpack.c.l.b16 %v330
      %v687 = vunpack.c.l.b16 %v331
      %v688 = vunpack.c.l.b16 %v332
      %v689 = vpack.c.b16 %v626, %v625
      %v690 = vpack.c.b16 %v628, %v627
      %v691 = vpack.c.b16 %v630, %v629
      %v692 = vpack.c.b16 %v632, %v631
      %v693 = vpack.c.b16 %v634, %v633
      %v694 = vpack.c.b16 %v636, %v635
      %v695 = vpack.c.b16 %v638, %v637
      %v696 = vpack.c.b16 %v640, %v639
      %v697 = vpack.c.b16 %v642, %v641
      %v698 = vpack.c.b16 %v644, %v643
      %v699 = vpack.c.b16 %v646, %v645
      %v700 = vpack.c.b16 %v648, %v647
      %v701 = vpack.c.b16 %v650, %v649
      %v702 = vpack.c.b16 %v652, %v651
      %v703 = vpack.c.b16 %v654, %v653
      %v704 = vpack.c.b16 %v656, %v655
      %v705 = vpack.c.b16 %v658, %v657
      %v706 = vpack.c.b16 %v660, %v659
      %v707 = vpack.c.b16 %v662, %v661
      %v708 = vpack.c.b16 %v664, %v663
      %v709 = vpack.c.b16 %v666, %v665
      %v710 = vpack.c.b16 %v668, %v667
      %v711 = vpack.c.b16 %v670, %v669
      %v712 = vpack.c.b16 %v672, %v671
      %v713 = vpack.c.b16 %v674, %v673
      %v714 = vpack.c.b16 %v676, %v675
      %v715 = vpack.c.b16 %v678, %v677
      %v716 = vpack.c.b16 %v680, %v679
      %v717 = vpack.c.b16 %v682, %v681
      %v718 = vpack.c.b16 %v684, %v683
      %v719 = vpack.c.b16 %v686, %v685
      %v720 = vpack.c.b16 %v688, %v687
      %721 = vrot.lane.b32.xlu0 %v689, 24
      %v722 = vpop.permute.xlu0 %721
      %723 = vrot.lane.b32.xlu0 %v690, 24
      %v724 = vpop.permute.xlu0 %723
      %725 = vrot.lane.b32.xlu0 %v691, 24
      %v726 = vpop.permute.xlu0 %725
      %727 = vrot.lane.b32.xlu0 %v692, 24
      %v728 = vpop.permute.xlu0 %727
      %729 = vrot.lane.b32.xlu0 %v693, 24
      %v730 = vpop.permute.xlu0 %729
      %731 = vrot.lane.b32.xlu0 %v694, 24
      %v732 = vpop.permute.xlu0 %731
      %733 = vrot.lane.b32.xlu0 %v695, 24
      %v734 = vpop.permute.xlu0 %733
      %735 = vrot.lane.b32.xlu0 %v696, 24
      %v736 = vpop.permute.xlu0 %735
      %737 = vrot.lane.b32.xlu0 %v697, 24
      %v738 = vpop.permute.xlu0 %737
      %739 = vrot.lane.b32.xlu0 %v698, 24
      %v740 = vpop.permute.xlu0 %739
      %741 = vrot.lane.b32.xlu0 %v699, 24
      %v742 = vpop.permute.xlu0 %741
      %743 = vrot.lane.b32.xlu0 %v700, 24
      %v744 = vpop.permute.xlu0 %743
      %745 = vrot.lane.b32.xlu0 %v701, 24
      %v746 = vpop.permute.xlu0 %745
      %747 = vrot.lane.b32.xlu0 %v702, 24
      %v748 = vpop.permute.xlu0 %747
      %749 = vrot.lane.b32.xlu0 %v703, 24
      %v750 = vpop.permute.xlu0 %749
      %751 = vrot.lane.b32.xlu0 %v704, 24
      %v752 = vpop.permute.xlu0 %751
      %753 = vrot.lane.b32.xlu0 %v705, 24
      %v754 = vpop.permute.xlu0 %753
      %755 = vrot.lane.b32.xlu0 %v706, 24
      %v756 = vpop.permute.xlu0 %755
      %757 = vrot.lane.b32.xlu0 %v707, 24
      %v758 = vpop.permute.xlu0 %757
      %759 = vrot.lane.b32.xlu0 %v708, 24
      %v760 = vpop.permute.xlu0 %759
      %761 = vrot.lane.b32.xlu0 %v709, 24
      %v762 = vpop.permute.xlu0 %761
      %763 = vrot.lane.b32.xlu0 %v710, 24
      %v764 = vpop.permute.xlu0 %763
      %765 = vrot.lane.b32.xlu0 %v711, 24
      %v766 = vpop.permute.xlu0 %765
      %767 = vrot.lane.b32.xlu0 %v712, 24
      %v768 = vpop.permute.xlu0 %767
      %769 = vrot.lane.b32.xlu0 %v713, 24
      %v770 = vpop.permute.xlu0 %769
      %771 = vrot.lane.b32.xlu0 %v714, 24
      %v772 = vpop.permute.xlu0 %771
      %773 = vrot.lane.b32.xlu0 %v715, 24
      %v774 = vpop.permute.xlu0 %773
      %775 = vrot.lane.b32.xlu0 %v716, 24
      %v776 = vpop.permute.xlu0 %775
      %777 = vrot.lane.b32.xlu0 %v717, 24
      %v778 = vpop.permute.xlu0 %777
      %779 = vrot.lane.b32.xlu0 %v718, 24
      %v780 = vpop.permute.xlu0 %779
      %781 = vrot.lane.b32.xlu0 %v719, 24
      %v782 = vpop.permute.xlu0 %781
      %783 = vrot.lane.b32.xlu0 %v720, 24
      %v784 = vpop.permute.xlu0 %783
      %v849 = vunpack.c.l.b16 %v337
      %v850 = vunpack.c.l.b16 %v338
      %v851 = vunpack.c.l.b16 %v339
      %v852 = vunpack.c.l.b16 %v340
      %v853 = vunpack.c.l.b16 %v341
      %v854 = vunpack.c.l.b16 %v342
      %v855 = vunpack.c.l.b16 %v343
      %v856 = vunpack.c.l.b16 %v344
      %v857 = vunpack.c.l.b16 %v345
      %v858 = vunpack.c.l.b16 %v346
      %v859 = vunpack.c.l.b16 %v347
      %v860 = vunpack.c.l.b16 %v348
      %v861 = vunpack.c.l.b16 %v349
      %v862 = vunpack.c.l.b16 %v350
      %v863 = vunpack.c.l.b16 %v351
      %v864 = vunpack.c.l.b16 %v352
      %v865 = vunpack.c.l.b16 %v353
      %v866 = vunpack.c.l.b16 %v354
      %v867 = vunpack.c.l.b16 %v355
      %v868 = vunpack.c.l.b16 %v356
      %v869 = vunpack.c.l.b16 %v357
      %v870 = vunpack.c.l.b16 %v358
      %v871 = vunpack.c.l.b16 %v359
      %v872 = vunpack.c.l.b16 %v360
      %v873 = vunpack.c.l.b16 %v361
      %v874 = vunpack.c.l.b16 %v362
      %v875 = vunpack.c.l.b16 %v363
      %v876 = vunpack.c.l.b16 %v364
      %v877 = vunpack.c.l.b16 %v365
      %v878 = vunpack.c.l.b16 %v366
      %v879 = vunpack.c.l.b16 %v367
      %v880 = vunpack.c.l.b16 %v368
      %v881 = vunpack.c.l.b16 %v369
      %v882 = vunpack.c.l.b16 %v370
      %v883 = vunpack.c.l.b16 %v371
      %v884 = vunpack.c.l.b16 %v372
      %v885 = vunpack.c.l.b16 %v373
      %v886 = vunpack.c.l.b16 %v374
      %v887 = vunpack.c.l.b16 %v375
      %v888 = vunpack.c.l.b16 %v376
      %v889 = vunpack.c.l.b16 %v377
      %v890 = vunpack.c.l.b16 %v378
      %v891 = vunpack.c.l.b16 %v379
      %v892 = vunpack.c.l.b16 %v380
      %v893 = vunpack.c.l.b16 %v381
      %v894 = vunpack.c.l.b16 %v382
      %v895 = vunpack.c.l.b16 %v383
      %v896 = vunpack.c.l.b16 %v384
      %v897 = vunpack.c.l.b16 %v385
      %v898 = vunpack.c.l.b16 %v386
      %v899 = vunpack.c.l.b16 %v387
      %v900 = vunpack.c.l.b16 %v388
      %v901 = vunpack.c.l.b16 %v389
      %v902 = vunpack.c.l.b16 %v390
      %v903 = vunpack.c.l.b16 %v391
      %v904 = vunpack.c.l.b16 %v392
      %v905 = vunpack.c.l.b16 %v393
      %v906 = vunpack.c.l.b16 %v394
      %v907 = vunpack.c.l.b16 %v395
      %v908 = vunpack.c.l.b16 %v396
      %v909 = vunpack.c.l.b16 %v397
      %v910 = vunpack.c.l.b16 %v398
      %v911 = vunpack.c.l.b16 %v399
      %v912 = vunpack.c.l.b16 %v400
      %v913 = vpack.c.b16 %v850, %v849
      %v914 = vpack.c.b16 %v852, %v851
      %v915 = vpack.c.b16 %v854, %v853
      %v916 = vpack.c.b16 %v856, %v855
      %v917 = vpack.c.b16 %v858, %v857
      %v918 = vpack.c.b16 %v860, %v859
      %v919 = vpack.c.b16 %v862, %v861
      %v920 = vpack.c.b16 %v864, %v863
      %v921 = vpack.c.b16 %v866, %v865
      %v922 = vpack.c.b16 %v868, %v867
      %v923 = vpack.c.b16 %v870, %v869
      %v924 = vpack.c.b16 %v872, %v871
      %v925 = vpack.c.b16 %v874, %v873
      %v926 = vpack.c.b16 %v876, %v875
      %v927 = vpack.c.b16 %v878, %v877
      %v928 = vpack.c.b16 %v880, %v879
      %v929 = vpack.c.b16 %v882, %v881
      %v930 = vpack.c.b16 %v884, %v883
      %v931 = vpack.c.b16 %v886, %v885
      %v932 = vpack.c.b16 %v888, %v887
      %v933 = vpack.c.b16 %v890, %v889
      %v934 = vpack.c.b16 %v892, %v891
      %v935 = vpack.c.b16 %v894, %v893
      %v936 = vpack.c.b16 %v896, %v895
      %v937 = vpack.c.b16 %v898, %v897
      %v938 = vpack.c.b16 %v900, %v899
      %v939 = vpack.c.b16 %v902, %v901
      %v940 = vpack.c.b16 %v904, %v903
      %v941 = vpack.c.b16 %v906, %v905
      %v942 = vpack.c.b16 %v908, %v907
      %v943 = vpack.c.b16 %v910, %v909
      %v944 = vpack.c.b16 %v912, %v911
      %945 = vrot.lane.b32.xlu0 %v913, 48
      %v946 = vpop.permute.xlu0 %945
      %947 = vrot.lane.b32.xlu0 %v914, 48
      %v948 = vpop.permute.xlu0 %947
      %949 = vrot.lane.b32.xlu0 %v915, 48
      %v950 = vpop.permute.xlu0 %949
      %951 = vrot.lane.b32.xlu0 %v916, 48
      %v952 = vpop.permute.xlu0 %951
      %953 = vrot.lane.b32.xlu0 %v917, 48
      %v954 = vpop.permute.xlu0 %953
      %955 = vrot.lane.b32.xlu0 %v918, 48
      %v956 = vpop.permute.xlu0 %955
      %957 = vrot.lane.b32.xlu0 %v919, 48
      %v958 = vpop.permute.xlu0 %957
      %959 = vrot.lane.b32.xlu0 %v920, 48
      %v960 = vpop.permute.xlu0 %959
      %961 = vrot.lane.b32.xlu0 %v921, 48
      %v962 = vpop.permute.xlu0 %961
      %963 = vrot.lane.b32.xlu0 %v922, 48
      %v964 = vpop.permute.xlu0 %963
      %965 = vrot.lane.b32.xlu0 %v923, 48
      %v966 = vpop.permute.xlu0 %965
      %967 = vrot.lane.b32.xlu0 %v924, 48
      %v968 = vpop.permute.xlu0 %967
      %969 = vrot.lane.b32.xlu0 %v925, 48
      %v970 = vpop.permute.xlu0 %969
      %971 = vrot.lane.b32.xlu0 %v926, 48
      %v972 = vpop.permute.xlu0 %971
      %973 = vrot.lane.b32.xlu0 %v927, 48
      %v974 = vpop.permute.xlu0 %973
      %975 = vrot.lane.b32.xlu0 %v928, 48
      %v976 = vpop.permute.xlu0 %975
      %977 = vrot.lane.b32.xlu0 %v929, 48
      %v978 = vpop.permute.xlu0 %977
      %979 = vrot.lane.b32.xlu0 %v930, 48
      %v980 = vpop.permute.xlu0 %979
      %981 = vrot.lane.b32.xlu0 %v931, 48
      %v982 = vpop.permute.xlu0 %981
      %983 = vrot.lane.b32.xlu0 %v932, 48
      %v984 = vpop.permute.xlu0 %983
      %985 = vrot.lane.b32.xlu0 %v933, 48
      %v986 = vpop.permute.xlu0 %985
      %987 = vrot.lane.b32.xlu0 %v934, 48
      %v988 = vpop.permute.xlu0 %987
      %989 = vrot.lane.b32.xlu0 %v935, 48
      %v990 = vpop.permute.xlu0 %989
      %991 = vrot.lane.b32.xlu0 %v936, 48
      %v992 = vpop.permute.xlu0 %991
      %993 = vrot.lane.b32.xlu0 %v937, 48
      %v994 = vpop.permute.xlu0 %993
      %995 = vrot.lane.b32.xlu0 %v938, 48
      %v996 = vpop.permute.xlu0 %995
      %997 = vrot.lane.b32.xlu0 %v939, 48
      %v998 = vpop.permute.xlu0 %997
      %999 = vrot.lane.b32.xlu0 %v940, 48
      %v1000 = vpop.permute.xlu0 %999
      %1001 = vrot.lane.b32.xlu0 %v941, 48
      %v1002 = vpop.permute.xlu0 %1001
      %1003 = vrot.lane.b32.xlu0 %v942, 48
      %v1004 = vpop.permute.xlu0 %1003
      %1005 = vrot.lane.b32.xlu0 %v943, 48
      %v1006 = vpop.permute.xlu0 %1005
      %1007 = vrot.lane.b32.xlu0 %v944, 48
      %v1008 = vpop.permute.xlu0 %1007
      %1009 = vrot.lane.b32.xlu0 %v529, 104
      %v1010 = vpop.permute.xlu0 %1009
      %1011 = vrot.lane.b32.xlu0 %v530, 104
      %v1012 = vpop.permute.xlu0 %1011
      %1013 = vrot.lane.b32.xlu0 %v531, 104
      %v1014 = vpop.permute.xlu0 %1013
      %1015 = vrot.lane.b32.xlu0 %v532, 104
      %v1016 = vpop.permute.xlu0 %1015
      %1017 = vrot.lane.b32.xlu0 %v533, 104
      %v1018 = vpop.permute.xlu0 %1017
      %1019 = vrot.lane.b32.xlu0 %v534, 104
      %v1020 = vpop.permute.xlu0 %1019
      %1021 = vrot.lane.b32.xlu0 %v535, 104
      %v1022 = vpop.permute.xlu0 %1021
      %1023 = vrot.lane.b32.xlu0 %v536, 104
      %v1024 = vpop.permute.xlu0 %1023
      %1025 = vrot.lane.b32.xlu0 %v537, 104
      %v1026 = vpop.permute.xlu0 %1025
      %1027 = vrot.lane.b32.xlu0 %v538, 104
      %v1028 = vpop.permute.xlu0 %1027
      %1029 = vrot.lane.b32.xlu0 %v539, 104
      %v1030 = vpop.permute.xlu0 %1029
      %1031 = vrot.lane.b32.xlu0 %v540, 104
      %v1032 = vpop.permute.xlu0 %1031
      %1033 = vrot.lane.b32.xlu0 %v541, 104
      %v1034 = vpop.permute.xlu0 %1033
      %1035 = vrot.lane.b32.xlu0 %v542, 104
      %v1036 = vpop.permute.xlu0 %1035
      %1037 = vrot.lane.b32.xlu0 %v543, 104
      %v1038 = vpop.permute.xlu0 %1037
      %1039 = vrot.lane.b32.xlu0 %v544, 104
      %v1040 = vpop.permute.xlu0 %1039
      %1041 = vrot.lane.b32.xlu0 %v545, 104
      %v1042 = vpop.permute.xlu0 %1041
      %1043 = vrot.lane.b32.xlu0 %v546, 104
      %v1044 = vpop.permute.xlu0 %1043
      %1045 = vrot.lane.b32.xlu0 %v547, 104
      %v1046 = vpop.permute.xlu0 %1045
      %1047 = vrot.lane.b32.xlu0 %v548, 104
      %v1048 = vpop.permute.xlu0 %1047
      %1049 = vrot.lane.b32.xlu0 %v549, 104
      %v1050 = vpop.permute.xlu0 %1049
      %1051 = vrot.lane.b32.xlu0 %v550, 104
      %v1052 = vpop.permute.xlu0 %1051
      %1053 = vrot.lane.b32.xlu0 %v551, 104
      %v1054 = vpop.permute.xlu0 %1053
      %1055 = vrot.lane.b32.xlu0 %v552, 104
      %v1056 = vpop.permute.xlu0 %1055
      %1057 = vrot.lane.b32.xlu0 %v553, 104
      %v1058 = vpop.permute.xlu0 %1057
      %1059 = vrot.lane.b32.xlu0 %v554, 104
      %v1060 = vpop.permute.xlu0 %1059
      %1061 = vrot.lane.b32.xlu0 %v555, 104
      %v1062 = vpop.permute.xlu0 %1061
      %1063 = vrot.lane.b32.xlu0 %v556, 104
      %v1064 = vpop.permute.xlu0 %1063
      %1065 = vrot.lane.b32.xlu0 %v557, 104
      %v1066 = vpop.permute.xlu0 %1065
      %1067 = vrot.lane.b32.xlu0 %v558, 104
      %v1068 = vpop.permute.xlu0 %1067
      %1069 = vrot.lane.b32.xlu0 %v559, 104
      %v1070 = vpop.permute.xlu0 %1069
      %1071 = vrot.lane.b32.xlu0 %v560, 104
      %v1072 = vpop.permute.xlu0 %1071
      %1073 = vrot.lane.b32.xlu0 %v913, 24
      %v1074 = vpop.permute.xlu0 %1073
      %1075 = vrot.lane.b32.xlu0 %v914, 24
      %v1076 = vpop.permute.xlu0 %1075
      %1077 = vrot.lane.b32.xlu0 %v915, 24
      %v1078 = vpop.permute.xlu0 %1077
      %1079 = vrot.lane.b32.xlu0 %v916, 24
      %v1080 = vpop.permute.xlu0 %1079
      %1081 = vrot.lane.b32.xlu0 %v917, 24
      %v1082 = vpop.permute.xlu0 %1081
      %1083 = vrot.lane.b32.xlu0 %v918, 24
      %v1084 = vpop.permute.xlu0 %1083
      %1085 = vrot.lane.b32.xlu0 %v919, 24
      %v1086 = vpop.permute.xlu0 %1085
      %1087 = vrot.lane.b32.xlu0 %v920, 24
      %v1088 = vpop.permute.xlu0 %1087
      %1089 = vrot.lane.b32.xlu0 %v921, 24
      %v1090 = vpop.permute.xlu0 %1089
      %1091 = vrot.lane.b32.xlu0 %v922, 24
      %v1092 = vpop.permute.xlu0 %1091
      %1093 = vrot.lane.b32.xlu0 %v923, 24
      %v1094 = vpop.permute.xlu0 %1093
      %1095 = vrot.lane.b32.xlu0 %v924, 24
      %v1096 = vpop.permute.xlu0 %1095
      %1097 = vrot.lane.b32.xlu0 %v925, 24
      %v1098 = vpop.permute.xlu0 %1097
      %1099 = vrot.lane.b32.xlu0 %v926, 24
      %v1100 = vpop.permute.xlu0 %1099
      %1101 = vrot.lane.b32.xlu0 %v927, 24
      %v1102 = vpop.permute.xlu0 %1101
      %1103 = vrot.lane.b32.xlu0 %v928, 24
      %v1104 = vpop.permute.xlu0 %1103
      %1105 = vrot.lane.b32.xlu0 %v929, 24
      %v1106 = vpop.permute.xlu0 %1105
      %1107 = vrot.lane.b32.xlu0 %v930, 24
      %v1108 = vpop.permute.xlu0 %1107
      %1109 = vrot.lane.b32.xlu0 %v931, 24
      %v1110 = vpop.permute.xlu0 %1109
      %1111 = vrot.lane.b32.xlu0 %v932, 24
      %v1112 = vpop.permute.xlu0 %1111
      %1113 = vrot.lane.b32.xlu0 %v933, 24
      %v1114 = vpop.permute.xlu0 %1113
      %1115 = vrot.lane.b32.xlu0 %v934, 24
      %v1116 = vpop.permute.xlu0 %1115
      %1117 = vrot.lane.b32.xlu0 %v935, 24
      %v1118 = vpop.permute.xlu0 %1117
      %1119 = vrot.lane.b32.xlu0 %v936, 24
      %v1120 = vpop.permute.xlu0 %1119
      %1121 = vrot.lane.b32.xlu0 %v937, 24
      %v1122 = vpop.permute.xlu0 %1121
      %1123 = vrot.lane.b32.xlu0 %v938, 24
      %v1124 = vpop.permute.xlu0 %1123
      %1125 = vrot.lane.b32.xlu0 %v939, 24
      %v1126 = vpop.permute.xlu0 %1125
      %1127 = vrot.lane.b32.xlu0 %v940, 24
      %v1128 = vpop.permute.xlu0 %1127
      %1129 = vrot.lane.b32.xlu0 %v941, 24
      %v1130 = vpop.permute.xlu0 %1129
      %1131 = vrot.lane.b32.xlu0 %v942, 24
      %v1132 = vpop.permute.xlu0 %1131
      %1133 = vrot.lane.b32.xlu0 %v943, 24
      %v1134 = vpop.permute.xlu0 %1133
      %1135 = vrot.lane.b32.xlu0 %v944, 24
      %v1136 = vpop.permute.xlu0 %1135
      %vm1137 = vcmask 195584
      %v1140 = vsel %vm1137, %v529, %v722
      %v1143 = vsel %vm1137, %v530, %v724
      %v1146 = vsel %vm1137, %v531, %v726
      %v1149 = vsel %vm1137, %v532, %v728
      %v1152 = vsel %vm1137, %v533, %v730
      %v1155 = vsel %vm1137, %v534, %v732
      %v1158 = vsel %vm1137, %v535, %v734
      %v1161 = vsel %vm1137, %v536, %v736
      %v1164 = vsel %vm1137, %v537, %v738
      %v1167 = vsel %vm1137, %v538, %v740
      %v1170 = vsel %vm1137, %v539, %v742
      %v1173 = vsel %vm1137, %v540, %v744
      %v1176 = vsel %vm1137, %v541, %v746
      %v1179 = vsel %vm1137, %v542, %v748
      %v1182 = vsel %vm1137, %v543, %v750
      %v1185 = vsel %vm1137, %v544, %v752
      %v1188 = vsel %vm1137, %v545, %v754
      %v1191 = vsel %vm1137, %v546, %v756
      %v1194 = vsel %vm1137, %v547, %v758
      %v1197 = vsel %vm1137, %v548, %v760
      %v1200 = vsel %vm1137, %v549, %v762
      %v1203 = vsel %vm1137, %v550, %v764
      %v1206 = vsel %vm1137, %v551, %v766
      %v1209 = vsel %vm1137, %v552, %v768
      %v1212 = vsel %vm1137, %v553, %v770
      %v1215 = vsel %vm1137, %v554, %v772
      %v1218 = vsel %vm1137, %v555, %v774
      %v1221 = vsel %vm1137, %v556, %v776
      %v1224 = vsel %vm1137, %v557, %v778
      %v1227 = vsel %vm1137, %v558, %v780
      %v1230 = vsel %vm1137, %v559, %v782
      %v1233 = vsel %vm1137, %v560, %v784
      %vm1234 = vcmask 392192
      %v1236 = vsel %vm1234, %v1140, %v946
      %v1238 = vsel %vm1234, %v1143, %v948
      %v1240 = vsel %vm1234, %v1146, %v950
      %v1242 = vsel %vm1234, %v1149, %v952
      %v1244 = vsel %vm1234, %v1152, %v954
      %v1246 = vsel %vm1234, %v1155, %v956
      %v1248 = vsel %vm1234, %v1158, %v958
      %v1250 = vsel %vm1234, %v1161, %v960
      %v1252 = vsel %vm1234, %v1164, %v962
      %v1254 = vsel %vm1234, %v1167, %v964
      %v1256 = vsel %vm1234, %v1170, %v966
      %v1258 = vsel %vm1234, %v1173, %v968
      %v1260 = vsel %vm1234, %v1176, %v970
      %v1262 = vsel %vm1234, %v1179, %v972
      %v1264 = vsel %vm1234, %v1182, %v974
      %v1266 = vsel %vm1234, %v1185, %v976
      %v1268 = vsel %vm1234, %v1188, %v978
      %v1270 = vsel %vm1234, %v1191, %v980
      %v1272 = vsel %vm1234, %v1194, %v982
      %v1274 = vsel %vm1234, %v1197, %v984
      %v1276 = vsel %vm1234, %v1200, %v986
      %v1278 = vsel %vm1234, %v1203, %v988
      %v1280 = vsel %vm1234, %v1206, %v990
      %v1282 = vsel %vm1234, %v1209, %v992
      %v1284 = vsel %vm1234, %v1212, %v994
      %v1286 = vsel %vm1234, %v1215, %v996
      %v1288 = vsel %vm1234, %v1218, %v998
      %v1290 = vsel %vm1234, %v1221, %v1000
      %v1292 = vsel %vm1234, %v1224, %v1002
      %v1294 = vsel %vm1234, %v1227, %v1004
      %v1296 = vsel %vm1234, %v1230, %v1006
      %v1298 = vsel %vm1234, %v1233, %v1008
      %vm1299 = vcmask 588800
      %v1301 = vsel %vm1299, %v1236, 0
      %v1303 = vsel %vm1299, %v1238, 0
      %v1305 = vsel %vm1299, %v1240, 0
      %v1307 = vsel %vm1299, %v1242, 0
      %v1309 = vsel %vm1299, %v1244, 0
      %v1311 = vsel %vm1299, %v1246, 0
      %v1313 = vsel %vm1299, %v1248, 0
      %v1315 = vsel %vm1299, %v1250, 0
      %v1317 = vsel %vm1299, %v1252, 0
      %v1319 = vsel %vm1299, %v1254, 0
      %v1321 = vsel %vm1299, %v1256, 0
      %v1323 = vsel %vm1299, %v1258, 0
      %v1325 = vsel %vm1299, %v1260, 0
      %v1327 = vsel %vm1299, %v1262, 0
      %v1329 = vsel %vm1299, %v1264, 0
      %v1331 = vsel %vm1299, %v1266, 0
      %v1333 = vsel %vm1299, %v1268, 0
      %v1335 = vsel %vm1299, %v1270, 0
      %v1337 = vsel %vm1299, %v1272, 0
      %v1339 = vsel %vm1299, %v1274, 0
      %v1341 = vsel %vm1299, %v1276, 0
      %v1343 = vsel %vm1299, %v1278, 0
      %v1345 = vsel %vm1299, %v1280, 0
      %v1347 = vsel %vm1299, %v1282, 0
      %v1349 = vsel %vm1299, %v1284, 0
      %v1351 = vsel %vm1299, %v1286, 0
      %v1353 = vsel %vm1299, %v1288, 0
      %v1355 = vsel %vm1299, %v1290, 0
      %v1357 = vsel %vm1299, %v1292, 0
      %v1359 = vsel %vm1299, %v1294, 0
      %v1361 = vsel %vm1299, %v1296, 0
      %v1363 = vsel %vm1299, %v1298, 0
      %v1367 = vsel %vm1137, %v1010, %v689
      %v1370 = vsel %vm1137, %v1012, %v690
      %v1373 = vsel %vm1137, %v1014, %v691
      %v1376 = vsel %vm1137, %v1016, %v692
      %v1379 = vsel %vm1137, %v1018, %v693
      %v1382 = vsel %vm1137, %v1020, %v694
      %v1385 = vsel %vm1137, %v1022, %v695
      %v1388 = vsel %vm1137, %v1024, %v696
      %v1391 = vsel %vm1137, %v1026, %v697
      %v1394 = vsel %vm1137, %v1028, %v698
      %v1397 = vsel %vm1137, %v1030, %v699
      %v1400 = vsel %vm1137, %v1032, %v700
      %v1403 = vsel %vm1137, %v1034, %v701
      %v1406 = vsel %vm1137, %v1036, %v702
      %v1409 = vsel %vm1137, %v1038, %v703
      %v1412 = vsel %vm1137, %v1040, %v704
      %v1415 = vsel %vm1137, %v1042, %v705
      %v1418 = vsel %vm1137, %v1044, %v706
      %v1421 = vsel %vm1137, %v1046, %v707
      %v1424 = vsel %vm1137, %v1048, %v708
      %v1427 = vsel %vm1137, %v1050, %v709
      %v1430 = vsel %vm1137, %v1052, %v710
      %v1433 = vsel %vm1137, %v1054, %v711
      %v1436 = vsel %vm1137, %v1056, %v712
      %v1439 = vsel %vm1137, %v1058, %v713
      %v1442 = vsel %vm1137, %v1060, %v714
      %v1445 = vsel %vm1137, %v1062, %v715
      %v1448 = vsel %vm1137, %v1064, %v716
      %v1451 = vsel %vm1137, %v1066, %v717
      %v1454 = vsel %vm1137, %v1068, %v718
      %v1457 = vsel %vm1137, %v1070, %v719
      %v1460 = vsel %vm1137, %v1072, %v720
      %v1462 = vsel %vm1234, %v1367, %v1074
      %v1464 = vsel %vm1234, %v1370, %v1076
      %v1466 = vsel %vm1234, %v1373, %v1078
      %v1468 = vsel %vm1234, %v1376, %v1080
      %v1470 = vsel %vm1234, %v1379, %v1082
      %v1472 = vsel %vm1234, %v1382, %v1084
      %v1474 = vsel %vm1234, %v1385, %v1086
      %v1476 = vsel %vm1234, %v1388, %v1088
      %v1478 = vsel %vm1234, %v1391, %v1090
      %v1480 = vsel %vm1234, %v1394, %v1092
      %v1482 = vsel %vm1234, %v1397, %v1094
      %v1484 = vsel %vm1234, %v1400, %v1096
      %v1486 = vsel %vm1234, %v1403, %v1098
      %v1488 = vsel %vm1234, %v1406, %v1100
      %v1490 = vsel %vm1234, %v1409, %v1102
      %v1492 = vsel %vm1234, %v1412, %v1104
      %v1494 = vsel %vm1234, %v1415, %v1106
      %v1496 = vsel %vm1234, %v1418, %v1108
      %v1498 = vsel %vm1234, %v1421, %v1110
      %v1500 = vsel %vm1234, %v1424, %v1112
      %v1502 = vsel %vm1234, %v1427, %v1114
      %v1504 = vsel %vm1234, %v1430, %v1116
      %v1506 = vsel %vm1234, %v1433, %v1118
      %v1508 = vsel %vm1234, %v1436, %v1120
      %v1510 = vsel %vm1234, %v1439, %v1122
      %v1512 = vsel %vm1234, %v1442, %v1124
      %v1514 = vsel %vm1234, %v1445, %v1126
      %v1516 = vsel %vm1234, %v1448, %v1128
      %v1518 = vsel %vm1234, %v1451, %v1130
      %v1520 = vsel %vm1234, %v1454, %v1132
      %v1522 = vsel %vm1234, %v1457, %v1134
      %v1524 = vsel %vm1234, %v1460, %v1136
      %v1525 = vsel %vm1299, %v1462, 0
      %v1527 = vsel %vm1299, %v1464, 0
      %v1529 = vsel %vm1299, %v1466, 0
      %v1531 = vsel %vm1299, %v1468, 0
      %v1533 = vsel %vm1299, %v1470, 0
      %v1535 = vsel %vm1299, %v1472, 0
      %v1537 = vsel %vm1299, %v1474, 0
      %v1539 = vsel %vm1299, %v1476, 0
      %v1541 = vsel %vm1299, %v1478, 0
      %v1543 = vsel %vm1299, %v1480, 0
      %v1545 = vsel %vm1299, %v1482, 0
      %v1547 = vsel %vm1299, %v1484, 0
      %v1549 = vsel %vm1299, %v1486, 0
      %v1551 = vsel %vm1299, %v1488, 0
      %v1553 = vsel %vm1299, %v1490, 0
      %v1555 = vsel %vm1299, %v1492, 0
      %v1557 = vsel %vm1299, %v1494, 0
      %v1559 = vsel %vm1299, %v1496, 0
      %v1561 = vsel %vm1299, %v1498, 0
      %v1563 = vsel %vm1299, %v1500, 0
      %v1565 = vsel %vm1299, %v1502, 0
      %v1567 = vsel %vm1299, %v1504, 0
      %v1569 = vsel %vm1299, %v1506, 0
      %v1571 = vsel %vm1299, %v1508, 0
      %v1573 = vsel %vm1299, %v1510, 0
      %v1575 = vsel %vm1299, %v1512, 0
      %v1577 = vsel %vm1299, %v1514, 0
      %v1579 = vsel %vm1299, %v1516, 0
      %v1581 = vsel %vm1299, %v1518, 0
      %v1583 = vsel %vm1299, %v1520, 0
      %v1585 = vsel %vm1299, %v1522, 0
      %v1587 = vsel %vm1299, %v1524, 0
      %v1589 = vld [vmem:[%s1] sm:$0xf]
      %v1590 = vld [vmem:[%s1 + $0x4] sm:$0xf]
      %v1591 = vld [vmem:[%s1 + $0x8] sm:$0xf]
      %v1592 = vld [vmem:[%s1 + $0xc] sm:$0xf]
      %v1593 = vld [vmem:[%s1 + $0x10] sm:$0xf]
      %v1594 = vld [vmem:[%s1 + $0x14] sm:$0xf]
      %v1595 = vld [vmem:[%s1 + $0x18] sm:$0xf]
      %v1596 = vld [vmem:[%s1 + $0x1c] sm:$0xf]
      %v1597 = vld [vmem:[%s1 + $0x20] sm:$0xf]
      %v1598 = vld [vmem:[%s1 + $0x24] sm:$0xf]
      %v1599 = vld [vmem:[%s1 + $0x28] sm:$0xf]
      %v1600 = vld [vmem:[%s1 + $0x2c] sm:$0xf]
      %v1601 = vld [vmem:[%s1 + $0x30] sm:$0xf]
      %v1602 = vld [vmem:[%s1 + $0x34] sm:$0xf]
      %v1603 = vld [vmem:[%s1 + $0x38] sm:$0xf]
      %v1604 = vld [vmem:[%s1 + $0x3c] sm:$0xf]
      %v1605 = vld [vmem:[%s1 + $0x40] sm:$0xf]
      %v1606 = vld [vmem:[%s1 + $0x44] sm:$0xf]
      %v1607 = vld [vmem:[%s1 + $0x48] sm:$0xf]
      %v1608 = vld [vmem:[%s1 + $0x4c] sm:$0xf]
      %v1609 = vld [vmem:[%s1 + $0x50] sm:$0xf]
      %v1610 = vld [vmem:[%s1 + $0x54] sm:$0xf]
      %v1611 = vld [vmem:[%s1 + $0x58] sm:$0xf]
      %v1612 = vld [vmem:[%s1 + $0x5c] sm:$0xf]
      %v1613 = vld [vmem:[%s1 + $0x60] sm:$0xf]
      %v1614 = vld [vmem:[%s1 + $0x64] sm:$0xf]
      %v1615 = vld [vmem:[%s1 + $0x68] sm:$0xf]
      %v1616 = vld [vmem:[%s1 + $0x6c] sm:$0xf]
      %v1617 = vld [vmem:[%s1 + $0x70] sm:$0xf]
      %v1618 = vld [vmem:[%s1 + $0x74] sm:$0xf]
      %v1619 = vld [vmem:[%s1 + $0x78] sm:$0xf]
      %v1620 = vld [vmem:[%s1 + $0x7c] sm:$0xf]
      %v1653 = vunpack.c.l.b16 %v1589
      %v1654 = vunpack.c.l.b16 %v1590
      %v1655 = vunpack.c.l.b16 %v1591
      %v1656 = vunpack.c.l.b16 %v1592
      %v1657 = vunpack.c.l.b16 %v1593
      %v1658 = vunpack.c.l.b16 %v1594
      %v1659 = vunpack.c.l.b16 %v1595
      %v1660 = vunpack.c.l.b16 %v1596
      %v1661 = vunpack.c.l.b16 %v1597
      %v1662 = vunpack.c.l.b16 %v1598
      %v1663 = vunpack.c.l.b16 %v1599
      %v1664 = vunpack.c.l.b16 %v1600
      %v1665 = vunpack.c.l.b16 %v1601
      %v1666 = vunpack.c.l.b16 %v1602
      %v1667 = vunpack.c.l.b16 %v1603
      %v1668 = vunpack.c.l.b16 %v1604
      %v1669 = vunpack.c.l.b16 %v1605
      %v1670 = vunpack.c.l.b16 %v1606
      %v1671 = vunpack.c.l.b16 %v1607
      %v1672 = vunpack.c.l.b16 %v1608
      %v1673 = vunpack.c.l.b16 %v1609
      %v1674 = vunpack.c.l.b16 %v1610
      %v1675 = vunpack.c.l.b16 %v1611
      %v1676 = vunpack.c.l.b16 %v1612
      %v1677 = vunpack.c.l.b16 %v1613
      %v1678 = vunpack.c.l.b16 %v1614
      %v1679 = vunpack.c.l.b16 %v1615
      %v1680 = vunpack.c.l.b16 %v1616
      %v1681 = vunpack.c.l.b16 %v1617
      %v1682 = vunpack.c.l.b16 %v1618
      %v1683 = vunpack.c.l.b16 %v1619
      %v1684 = vunpack.c.l.b16 %v1620
      %v1685 = vpack.c.b16 %v1654, %v1653
      %v1686 = vpack.c.b16 %v1656, %v1655
      %v1687 = vpack.c.b16 %v1658, %v1657
      %v1688 = vpack.c.b16 %v1660, %v1659
      %v1689 = vpack.c.b16 %v1662, %v1661
      %v1690 = vpack.c.b16 %v1664, %v1663
      %v1691 = vpack.c.b16 %v1666, %v1665
      %v1692 = vpack.c.b16 %v1668, %v1667
      %v1693 = vpack.c.b16 %v1670, %v1669
      %v1694 = vpack.c.b16 %v1672, %v1671
      %v1695 = vpack.c.b16 %v1674, %v1673
      %v1696 = vpack.c.b16 %v1676, %v1675
      %v1697 = vpack.c.b16 %v1678, %v1677
      %v1698 = vpack.c.b16 %v1680, %v1679
      %v1699 = vpack.c.b16 %v1682, %v1681
      %v1700 = vpack.c.b16 %v1684, %v1683
      %1717 = vmatprep.subr.bf16.mxu0 0
      %1718 = vmatpush1.bf16.msra.mxu0 %v1685
      %1719 = vmatprep.subr.bf16.mxu0 0
      %1720 = vmatpush1.bf16.msra.mxu0 %v1686
      %1721 = vmatprep.subr.bf16.mxu0 0
      %1722 = vmatpush1.bf16.msra.mxu0 %v1687
      %1723 = vmatprep.subr.bf16.mxu0 0
      %1724 = vmatpush1.bf16.msra.mxu0 %v1688
      %1725 = vmatprep.subr.bf16.mxu0 0
      %1726 = vmatpush1.bf16.msra.mxu0 %v1689
      %1727 = vmatprep.subr.bf16.mxu0 0
      %1728 = vmatpush1.bf16.msra.mxu0 %v1690
      %1729 = vmatprep.subr.bf16.mxu0 0
      %1730 = vmatpush1.bf16.msra.mxu0 %v1691
      %1731 = vmatprep.subr.bf16.mxu0 0
      %1732 = vmatpush1.bf16.msra.mxu0 %v1692
      %1733 = vmatprep.subr.bf16.mxu0 0
      %1734 = vmatpush1.bf16.msra.mxu0 %v1693
      %1735 = vmatprep.subr.bf16.mxu0 0
      %1736 = vmatpush1.bf16.msra.mxu0 %v1694
      %1737 = vmatprep.subr.bf16.mxu0 0
      %1738 = vmatpush1.bf16.msra.mxu0 %v1695
      %1739 = vmatprep.subr.bf16.mxu0 0
      %1740 = vmatpush1.bf16.msra.mxu0 %v1696
      %1741 = vmatprep.subr.bf16.mxu0 0
      %1742 = vmatpush1.bf16.msra.mxu0 %v1697
      %1743 = vmatprep.subr.bf16.mxu0 0
      %1744 = vmatpush1.bf16.msra.mxu0 %v1698
      %1745 = vmatprep.subr.bf16.mxu0 0
      %1746 = vmatpush1.bf16.msra.mxu0 %v1699
      %1747 = vmatprep.subr.bf16.mxu0 0
      %1748 = vmatpush1.bf16.msra.mxu0 %v1700
      %1749 = vmatprep.mubr.bf16.mxu0 %v1525
      %1750 = vmatmul.mubr.bf16.gmra.mrb[0].mxu0 %v1301
      %v1751 = vpop.f32.mrb[0].mxu0
      %v1752 = vadd.f32 0.0, %v1751
      %v1753 = vpop.f32.mrb[0].mxu0
      %v1754 = vpop.f32.mrb[0].mxu0
      %v1755 = vadd.f32 0.0, %v1754
      %v1756 = vpop.f32.mrb[0].mxu0
      %1757 = vmatprep.mubr.bf16.mxu0 %v1527
      %1758 = vmatmul.mubr.bf16.gmra.mrb[0].mxu0 %v1303
      %v1759 = vpop.f32.mrb[0].mxu0
      %v1760 = vadd.f32 0.0, %v1759
      %v1761 = vpop.f32.mrb[0].mxu0
      %v1762 = vpop.f32.mrb[0].mxu0
      %v1763 = vadd.f32 0.0, %v1762
      %v1764 = vpop.f32.mrb[0].mxu0
      %1765 = vmatprep.mubr.bf16.mxu0 %v1529
      %1766 = vmatmul.mubr.bf16.gmra.mrb[0].mxu0 %v1305
      %v1767 = vpop.f32.mrb[0].mxu0
      %v1768 = vadd.f32 0.0, %v1767
      %v1769 = vpop.f32.mrb[0].mxu0
      %v1770 = vpop.f32.mrb[0].mxu0
      %v1771 = vadd.f32 0.0, %v1770
      %v1772 = vpop.f32.mrb[0].mxu0
      %1773 = vmatprep.mubr.bf16.mxu0 %v1531
      %1774 = vmatmul.mubr.bf16.gmra.mrb[0].mxu0 %v1307
      %v1775 = vpop.f32.mrb[0].mxu0
      %v1776 = vadd.f32 0.0, %v1775
      %v1777 = vpop.f32.mrb[0].mxu0
      %v1778 = vpop.f32.mrb[0].mxu0
      %v1779 = vadd.f32 0.0, %v1778
      %v1780 = vpop.f32.mrb[0].mxu0
      %1781 = vmatprep.mubr.bf16.mxu0 %v1533
      %1782 = vmatmul.mubr.bf16.gmra.mrb[0].mxu0 %v1309
      %v1783 = vpop.f32.mrb[0].mxu0
      %v1784 = vadd.f32 0.0, %v1783
      %v1785 = vpop.f32.mrb[0].mxu0
      %v1786 = vpop.f32.mrb[0].mxu0
      %v1787 = vadd.f32 0.0, %v1786
      %v1788 = vpop.f32.mrb[0].mxu0
      %1789 = vmatprep.mubr.bf16.mxu0 %v1535
      %1790 = vmatmul.mubr.bf16.gmra.mrb[0].mxu0 %v1311
      %v1791 = vpop.f32.mrb[0].mxu0
      %v1792 = vadd.f32 0.0, %v1791
      %v1793 = vpop.f32.mrb[0].mxu0
      %v1794 = vpop.f32.mrb[0].mxu0
      %v1795 = vadd.f32 0.0, %v1794
      %v1796 = vpop.f32.mrb[0].mxu0
      %1797 = vmatprep.mubr.bf16.mxu0 %v1537
      %1798 = vmatmul.mubr.bf16.gmra.mrb[0].mxu0 %v1313
      %v1799 = vpop.f32.mrb[0].mxu0
      %v1800 = vadd.f32 0.0, %v1799
      %v1801 = vpop.f32.mrb[0].mxu0
      %v1802 = vpop.f32.mrb[0].mxu0
      %v1803 = vadd.f32 0.0, %v1802
      %v1804 = vpop.f32.mrb[0].mxu0
      %1805 = vmatprep.mubr.bf16.mxu0 %v1539
      %1806 = vmatmul.mubr.bf16.gmra.mrb[0].mxu0 %v1315
      %v1807 = vpop.f32.mrb[0].mxu0
      %v1808 = vadd.f32 0.0, %v1807
      %v1809 = vpop.f32.mrb[0].mxu0
      %v1810 = vpop.f32.mrb[0].mxu0
      %v1811 = vadd.f32 0.0, %v1810
      %v1812 = vpop.f32.mrb[0].mxu0
      %1813 = vmatprep.mubr.bf16.mxu0 %v1541
      %1814 = vmatmul.mubr.bf16.gmra.mrb[0].mxu0 %v1317
      %v1815 = vpop.f32.mrb[0].mxu0
      %v1816 = vadd.f32 0.0, %v1815
      %v1817 = vpop.f32.mrb[0].mxu0
      %v1818 = vpop.f32.mrb[0].mxu0
      %v1819 = vadd.f32 0.0, %v1818
      %v1820 = vpop.f32.mrb[0].mxu0
      %1821 = vmatprep.mubr.bf16.mxu0 %v1543
      %1822 = vmatmul.mubr.bf16.gmra.mrb[0].mxu0 %v1319
      %v1823 = vpop.f32.mrb[0].mxu0
      %v1824 = vadd.f32 0.0, %v1823
      %v1825 = vpop.f32.mrb[0].mxu0
      %v1826 = vpop.f32.mrb[0].mxu0
      %v1827 = vadd.f32 0.0, %v1826
      %v1828 = vpop.f32.mrb[0].mxu0
      %1829 = vmatprep.mubr.bf16.mxu0 %v1545
      %1830 = vmatmul.mubr.bf16.gmra.mrb[0].mxu0 %v1321
      %v1831 = vpop.f32.mrb[0].mxu0
      %v1832 = vadd.f32 0.0, %v1831
      %v1833 = vpop.f32.mrb[0].mxu0
      %v1834 = vpop.f32.mrb[0].mxu0
      %v1835 = vadd.f32 0.0, %v1834
      %v1836 = vpop.f32.mrb[0].mxu0
      %1837 = vmatprep.mubr.bf16.mxu0 %v1547
      %1838 = vmatmul.mubr.bf16.gmra.mrb[0].mxu0 %v1323
      %v1839 = vpop.f32.mrb[0].mxu0
      %v1840 = vadd.f32 0.0, %v1839
      %v1841 = vpop.f32.mrb[0].mxu0
      %v1842 = vpop.f32.mrb[0].mxu0
      %v1843 = vadd.f32 0.0, %v1842
      %v1844 = vpop.f32.mrb[0].mxu0
      %1845 = vmatprep.mubr.bf16.mxu0 %v1549
      %1846 = vmatmul.mubr.bf16.gmra.mrb[0].mxu0 %v1325
      %v1847 = vpop.f32.mrb[0].mxu0
      %v1848 = vadd.f32 0.0, %v1847
      %v1849 = vpop.f32.mrb[0].mxu0
      %v1850 = vpop.f32.mrb[0].mxu0
      %v1851 = vadd.f32 0.0, %v1850
      %v1852 = vpop.f32.mrb[0].mxu0
      %1853 = vmatprep.mubr.bf16.mxu0 %v1551
      %1854 = vmatmul.mubr.bf16.gmra.mrb[0].mxu0 %v1327
      %v1855 = vpop.f32.mrb[0].mxu0
      %v1856 = vadd.f32 0.0, %v1855
      %v1857 = vpop.f32.mrb[0].mxu0
      %v1858 = vpop.f32.mrb[0].mxu0
      %v1859 = vadd.f32 0.0, %v1858
      %v1860 = vpop.f32.mrb[0].mxu0
      %1861 = vmatprep.mubr.bf16.mxu0 %v1553
      %1862 = vmatmul.mubr.bf16.gmra.mrb[0].mxu0 %v1329
      %v1863 = vpop.f32.mrb[0].mxu0
      %v1864 = vadd.f32 0.0, %v1863
      %v1865 = vpop.f32.mrb[0].mxu0
      %v1866 = vpop.f32.mrb[0].mxu0
      %v1867 = vadd.f32 0.0, %v1866
      %v1868 = vpop.f32.mrb[0].mxu0
      %1869 = vmatprep.mubr.bf16.mxu0 %v1555
      %1870 = vmatmul.mubr.bf16.gmra.mrb[0].mxu0 %v1331
      %v1871 = vpop.f32.mrb[0].mxu0
      %v1872 = vadd.f32 0.0, %v1871
      %v1873 = vpop.f32.mrb[0].mxu0
      %v1874 = vpop.f32.mrb[0].mxu0
      %v1875 = vadd.f32 0.0, %v1874
      %v1876 = vpop.f32.mrb[0].mxu0
      %1877 = vmatprep.mubr.bf16.mxu0 %v1557
      %1878 = vmatmul.mubr.bf16.gmra.mrb[0].mxu0 %v1333
      %v1879 = vpop.f32.mrb[0].mxu0
      %v1880 = vadd.f32 0.0, %v1879
      %v1881 = vpop.f32.mrb[0].mxu0
      %v1882 = vpop.f32.mrb[0].mxu0
      %v1883 = vadd.f32 0.0, %v1882
      %v1884 = vpop.f32.mrb[0].mxu0
      %1885 = vmatprep.mubr.bf16.mxu0 %v1559
      %1886 = vmatmul.mubr.bf16.gmra.mrb[0].mxu0 %v1335
      %v1887 = vpop.f32.mrb[0].mxu0
      %v1888 = vadd.f32 0.0, %v1887
      %v1889 = vpop.f32.mrb[0].mxu0
      %v1890 = vpop.f32.mrb[0].mxu0
      %v1891 = vadd.f32 0.0, %v1890
      %v1892 = vpop.f32.mrb[0].mxu0
      %1893 = vmatprep.mubr.bf16.mxu0 %v1561
      %1894 = vmatmul.mubr.bf16.gmra.mrb[0].mxu0 %v1337
      %v1895 = vpop.f32.mrb[0].mxu0
      %v1896 = vadd.f32 0.0, %v1895
      %v1897 = vpop.f32.mrb[0].mxu0
      %v1898 = vpop.f32.mrb[0].mxu0
      %v1899 = vadd.f32 0.0, %v1898
      %v1900 = vpop.f32.mrb[0].mxu0
      %1901 = vmatprep.mubr.bf16.mxu0 %v1563
      %1902 = vmatmul.mubr.bf16.gmra.mrb[0].mxu0 %v1339
      %v1903 = vpop.f32.mrb[0].mxu0
      %v1904 = vadd.f32 0.0, %v1903
      %v1905 = vpop.f32.mrb[0].mxu0
      %v1906 = vpop.f32.mrb[0].mxu0
      %v1907 = vadd.f32 0.0, %v1906
      %v1908 = vpop.f32.mrb[0].mxu0
      %1909 = vmatprep.mubr.bf16.mxu0 %v1565
      %1910 = vmatmul.mubr.bf16.gmra.mrb[0].mxu0 %v1341
      %v1911 = vpop.f32.mrb[0].mxu0
      %v1912 = vadd.f32 0.0, %v1911
      %v1913 = vpop.f32.mrb[0].mxu0
      %v1914 = vpop.f32.mrb[0].mxu0
      %v1915 = vadd.f32 0.0, %v1914
      %v1916 = vpop.f32.mrb[0].mxu0
      %1917 = vmatprep.mubr.bf16.mxu0 %v1567
      %1918 = vmatmul.mubr.bf16.gmra.mrb[0].mxu0 %v1343
      %v1919 = vpop.f32.mrb[0].mxu0
      %v1920 = vadd.f32 0.0, %v1919
      %v1921 = vpop.f32.mrb[0].mxu0
      %v1922 = vpop.f32.mrb[0].mxu0
      %v1923 = vadd.f32 0.0, %v1922
      %v1924 = vpop.f32.mrb[0].mxu0
      %1925 = vmatprep.mubr.bf16.mxu0 %v1569
      %1926 = vmatmul.mubr.bf16.gmra.mrb[0].mxu0 %v1345
      %v1927 = vpop.f32.mrb[0].mxu0
      %v1928 = vadd.f32 0.0, %v1927
      %v1929 = vpop.f32.mrb[0].mxu0
      %v1930 = vpop.f32.mrb[0].mxu0
      %v1931 = vadd.f32 0.0, %v1930
      %v1932 = vpop.f32.mrb[0].mxu0
      %1933 = vmatprep.mubr.bf16.mxu0 %v1571
      %1934 = vmatmul.mubr.bf16.gmra.mrb[0].mxu0 %v1347
      %v1935 = vpop.f32.mrb[0].mxu0
      %v1936 = vadd.f32 0.0, %v1935
      %v1937 = vpop.f32.mrb[0].mxu0
      %v1938 = vpop.f32.mrb[0].mxu0
      %v1939 = vadd.f32 0.0, %v1938
      %v1940 = vpop.f32.mrb[0].mxu0
      %1941 = vmatprep.mubr.bf16.mxu0 %v1573
      %1942 = vmatmul.mubr.bf16.gmra.mrb[0].mxu0 %v1349
      %v1943 = vpop.f32.mrb[0].mxu0
      %v1944 = vadd.f32 0.0, %v1943
      %v1945 = vpop.f32.mrb[0].mxu0
      %v1946 = vpop.f32.mrb[0].mxu0
      %v1947 = vadd.f32 0.0, %v1946
      %v1948 = vpop.f32.mrb[0].mxu0
      %1949 = vmatprep.mubr.bf16.mxu0 %v1575
      %1950 = vmatmul.mubr.bf16.gmra.mrb[0].mxu0 %v1351
      %v1951 = vpop.f32.mrb[0].mxu0
      %v1952 = vadd.f32 0.0, %v1951
      %v1953 = vpop.f32.mrb[0].mxu0
      %v1954 = vpop.f32.mrb[0].mxu0
      %v1955 = vadd.f32 0.0, %v1954
      %v1956 = vpop.f32.mrb[0].mxu0
      %1957 = vmatprep.mubr.bf16.mxu0 %v1577
      %1958 = vmatmul.mubr.bf16.gmra.mrb[0].mxu0 %v1353
      %v1959 = vpop.f32.mrb[0].mxu0
      %v1960 = vadd.f32 0.0, %v1959
      %v1961 = vpop.f32.mrb[0].mxu0
      %v1962 = vpop.f32.mrb[0].mxu0
      %v1963 = vadd.f32 0.0, %v1962
      %v1964 = vpop.f32.mrb[0].mxu0
      %1965 = vmatprep.mubr.bf16.mxu0 %v1579
      %1966 = vmatmul.mubr.bf16.gmra.mrb[0].mxu0 %v1355
      %v1967 = vpop.f32.mrb[0].mxu0
      %v1968 = vadd.f32 0.0, %v1967
      %v1969 = vpop.f32.mrb[0].mxu0
      %v1970 = vpop.f32.mrb[0].mxu0
      %v1971 = vadd.f32 0.0, %v1970
      %v1972 = vpop.f32.mrb[0].mxu0
      %1973 = vmatprep.mubr.bf16.mxu0 %v1581
      %1974 = vmatmul.mubr.bf16.gmra.mrb[0].mxu0 %v1357
      %v1975 = vpop.f32.mrb[0].mxu0
      %v1976 = vadd.f32 0.0, %v1975
      %v1977 = vpop.f32.mrb[0].mxu0
      %v1978 = vpop.f32.mrb[0].mxu0
      %v1979 = vadd.f32 0.0, %v1978
      %v1980 = vpop.f32.mrb[0].mxu0
      %1981 = vmatprep.mubr.bf16.mxu0 %v1583
      %1982 = vmatmul.mubr.bf16.gmra.mrb[0].mxu0 %v1359
      %v1983 = vpop.f32.mrb[0].mxu0
      %v1984 = vadd.f32 0.0, %v1983
      %v1985 = vpop.f32.mrb[0].mxu0
      %v1986 = vpop.f32.mrb[0].mxu0
      %v1987 = vadd.f32 0.0, %v1986
      %v1988 = vpop.f32.mrb[0].mxu0
      %1989 = vmatprep.mubr.bf16.mxu0 %v1585
      %1990 = vmatmul.mubr.bf16.gmra.mrb[0].mxu0 %v1361
      %v1991 = vpop.f32.mrb[0].mxu0
      %v1992 = vadd.f32 0.0, %v1991
      %v1993 = vpop.f32.mrb[0].mxu0
      %v1994 = vpop.f32.mrb[0].mxu0
      %v1995 = vadd.f32 0.0, %v1994
      %v1996 = vpop.f32.mrb[0].mxu0
      %1997 = vmatprep.mubr.bf16.mxu0 %v1587
      %1998 = vmatmul.mubr.bf16.gmra.mrb[0].mxu0 %v1363
      %v1999 = vpop.f32.mrb[0].mxu0
      %v2000 = vadd.f32 0.0, %v1999
      %v2001 = vpop.f32.mrb[0].mxu0
      %v2002 = vpop.f32.mrb[0].mxu0
      %v2003 = vadd.f32 0.0, %v2002
      %v2004 = vpop.f32.mrb[0].mxu0
      %2005 = vdwg.mxu0
      %v2006 = vld [vmem:[%s2] sm:$0x3]
      %v2007 = vlaneseq
      %v2008 = vshrl.u32 %v2007, 7
      %v2009 = vsub.s32 0, %v2008
      %v2010 = vrot.slane %v2006, %v2009
      %v2011 = vmul.f32 %v1752, %v2010
      %v2012 = vmul.f32 %v1755, %v2010
      %v2013 = vmul.f32 %v1760, %v2010
      %v2014 = vmul.f32 %v1763, %v2010
      %v2015 = vmul.f32 %v1768, %v2010
      %v2016 = vmul.f32 %v1771, %v2010
      %v2017 = vmul.f32 %v1776, %v2010
      %v2018 = vmul.f32 %v1779, %v2010
      %v2019 = vmul.f32 %v1784, %v2010
      %v2020 = vmul.f32 %v1787, %v2010
      %v2021 = vmul.f32 %v1792, %v2010
      %v2022 = vmul.f32 %v1795, %v2010
      %v2023 = vmul.f32 %v1800, %v2010
      %v2024 = vmul.f32 %v1803, %v2010
      %v2025 = vmul.f32 %v1808, %v2010
      %v2026 = vmul.f32 %v1811, %v2010
      %v2027 = vmul.f32 %v1816, %v2010
      %v2028 = vmul.f32 %v1819, %v2010
      %v2029 = vmul.f32 %v1824, %v2010
      %v2030 = vmul.f32 %v1827, %v2010
      %v2031 = vmul.f32 %v1832, %v2010
      %v2032 = vmul.f32 %v1835, %v2010
      %v2033 = vmul.f32 %v1840, %v2010
      %v2034 = vmul.f32 %v1843, %v2010
      %v2035 = vmul.f32 %v1848, %v2010
      %v2036 = vmul.f32 %v1851, %v2010
      %v2037 = vmul.f32 %v1856, %v2010
      %v2038 = vmul.f32 %v1859, %v2010
      %v2039 = vmul.f32 %v1864, %v2010
      %v2040 = vmul.f32 %v1867, %v2010
      %v2041 = vmul.f32 %v1872, %v2010
      %v2042 = vmul.f32 %v1875, %v2010
      %v2043 = vmul.f32 %v1880, %v2010
      %v2044 = vmul.f32 %v1883, %v2010
      %v2045 = vmul.f32 %v1888, %v2010
      %v2046 = vmul.f32 %v1891, %v2010
      %v2047 = vmul.f32 %v1896, %v2010
      %v2048 = vmul.f32 %v1899, %v2010
      %v2049 = vmul.f32 %v1904, %v2010
      %v2050 = vmul.f32 %v1907, %v2010
      %v2051 = vmul.f32 %v1912, %v2010
      %v2052 = vmul.f32 %v1915, %v2010
      %v2053 = vmul.f32 %v1920, %v2010
      %v2054 = vmul.f32 %v1923, %v2010
      %v2055 = vmul.f32 %v1928, %v2010
      %v2056 = vmul.f32 %v1931, %v2010
      %v2057 = vmul.f32 %v1936, %v2010
      %v2058 = vmul.f32 %v1939, %v2010
      %v2059 = vmul.f32 %v1944, %v2010
      %v2060 = vmul.f32 %v1947, %v2010
      %v2061 = vmul.f32 %v1952, %v2010
      %v2062 = vmul.f32 %v1955, %v2010
      %v2063 = vmul.f32 %v1960, %v2010
      %v2064 = vmul.f32 %v1963, %v2010
      %v2065 = vmul.f32 %v1968, %v2010
      %v2066 = vmul.f32 %v1971, %v2010
      %v2067 = vmul.f32 %v1976, %v2010
      %v2068 = vmul.f32 %v1979, %v2010
      %v2069 = vmul.f32 %v1984, %v2010
      %v2070 = vmul.f32 %v1987, %v2010
      %v2071 = vmul.f32 %v1992, %v2010
      %v2072 = vmul.f32 %v1995, %v2010
      %v2073 = vmul.f32 %v2000, %v2010
      %v2074 = vmul.f32 %v2003, %v2010
      %v2075 = vlaneseq
      %v2076 = vshrl.u32 %v2075, 7
      %v2077 = vsub.s32 1, %v2076
      %v2078 = vrot.slane %v2006, %v2077
      %v2079 = vadd.f32 %v2011, %v2078
      %v2080 = vadd.f32 %v2012, %v2078
      %v2081 = vadd.f32 %v2013, %v2078
      %v2082 = vadd.f32 %v2014, %v2078
      %v2083 = vadd.f32 %v2015, %v2078
      %v2084 = vadd.f32 %v2016, %v2078
      %v2085 = vadd.f32 %v2017, %v2078
      %v2086 = vadd.f32 %v2018, %v2078
      %v2087 = vadd.f32 %v2019, %v2078
      %v2088 = vadd.f32 %v2020, %v2078
      %v2089 = vadd.f32 %v2021, %v2078
      %v2090 = vadd.f32 %v2022, %v2078
      %v2091 = vadd.f32 %v2023, %v2078
      %v2092 = vadd.f32 %v2024, %v2078
      %v2093 = vadd.f32 %v2025, %v2078
      %v2094 = vadd.f32 %v2026, %v2078
      %v2095 = vadd.f32 %v2027, %v2078
      %v2096 = vadd.f32 %v2028, %v2078
      %v2097 = vadd.f32 %v2029, %v2078
      %v2098 = vadd.f32 %v2030, %v2078
      %v2099 = vadd.f32 %v2031, %v2078
      %v2100 = vadd.f32 %v2032, %v2078
      %v2101 = vadd.f32 %v2033, %v2078
      %v2102 = vadd.f32 %v2034, %v2078
      %v2103 = vadd.f32 %v2035, %v2078
      %v2104 = vadd.f32 %v2036, %v2078
      %v2105 = vadd.f32 %v2037, %v2078
      %v2106 = vadd.f32 %v2038, %v2078
      %v2107 = vadd.f32 %v2039, %v2078
      %v2108 = vadd.f32 %v2040, %v2078
      %v2109 = vadd.f32 %v2041, %v2078
      %v2110 = vadd.f32 %v2042, %v2078
      %v2111 = vadd.f32 %v2043, %v2078
      %v2112 = vadd.f32 %v2044, %v2078
      %v2113 = vadd.f32 %v2045, %v2078
      %v2114 = vadd.f32 %v2046, %v2078
      %v2115 = vadd.f32 %v2047, %v2078
      %v2116 = vadd.f32 %v2048, %v2078
      %v2117 = vadd.f32 %v2049, %v2078
      %v2118 = vadd.f32 %v2050, %v2078
      %v2119 = vadd.f32 %v2051, %v2078
      %v2120 = vadd.f32 %v2052, %v2078
      %v2121 = vadd.f32 %v2053, %v2078
      %v2122 = vadd.f32 %v2054, %v2078
      %v2123 = vadd.f32 %v2055, %v2078
      %v2124 = vadd.f32 %v2056, %v2078
      %v2125 = vadd.f32 %v2057, %v2078
      %v2126 = vadd.f32 %v2058, %v2078
      %v2127 = vadd.f32 %v2059, %v2078
      %v2128 = vadd.f32 %v2060, %v2078
      %v2129 = vadd.f32 %v2061, %v2078
      %v2130 = vadd.f32 %v2062, %v2078
      %v2131 = vadd.f32 %v2063, %v2078
      %v2132 = vadd.f32 %v2064, %v2078
      %v2133 = vadd.f32 %v2065, %v2078
      %v2134 = vadd.f32 %v2066, %v2078
      %v2135 = vadd.f32 %v2067, %v2078
      %v2136 = vadd.f32 %v2068, %v2078
      %v2137 = vadd.f32 %v2069, %v2078
      %v2138 = vadd.f32 %v2070, %v2078
      %v2139 = vadd.f32 %v2071, %v2078
      %v2140 = vadd.f32 %v2072, %v2078
      %v2141 = vadd.f32 %v2073, %v2078
      %v2142 = vadd.f32 %v2074, %v2078
      %v2143 = vmax.f32 %v2079, 0.0
      %v2144 = vmax.f32 %v2080, 0.0
      %v2145 = vmax.f32 %v2081, 0.0
      %v2146 = vmax.f32 %v2082, 0.0
      %v2147 = vmax.f32 %v2083, 0.0
      %v2148 = vmax.f32 %v2084, 0.0
      %v2149 = vmax.f32 %v2085, 0.0
      %v2150 = vmax.f32 %v2086, 0.0
      %v2151 = vmax.f32 %v2087, 0.0
      %v2152 = vmax.f32 %v2088, 0.0
      %v2153 = vmax.f32 %v2089, 0.0
      %v2154 = vmax.f32 %v2090, 0.0
      %v2155 = vmax.f32 %v2091, 0.0
      %v2156 = vmax.f32 %v2092, 0.0
      %v2157 = vmax.f32 %v2093, 0.0
      %v2158 = vmax.f32 %v2094, 0.0
      %v2159 = vmax.f32 %v2095, 0.0
      %v2160 = vmax.f32 %v2096, 0.0
      %v2161 = vmax.f32 %v2097, 0.0
      %v2162 = vmax.f32 %v2098, 0.0
      %v2163 = vmax.f32 %v2099, 0.0
      %v2164 = vmax.f32 %v2100, 0.0
      %v2165 = vmax.f32 %v2101, 0.0
      %v2166 = vmax.f32 %v2102, 0.0
      %v2167 = vmax.f32 %v2103, 0.0
      %v2168 = vmax.f32 %v2104, 0.0
      %v2169 = vmax.f32 %v2105, 0.0
      %v2170 = vmax.f32 %v2106, 0.0
      %v2171 = vmax.f32 %v2107, 0.0
      %v2172 = vmax.f32 %v2108, 0.0
      %v2173 = vmax.f32 %v2109, 0.0
      %v2174 = vmax.f32 %v2110, 0.0
      %v2175 = vmax.f32 %v2111, 0.0
      %v2176 = vmax.f32 %v2112, 0.0
      %v2177 = vmax.f32 %v2113, 0.0
      %v2178 = vmax.f32 %v2114, 0.0
      %v2179 = vmax.f32 %v2115, 0.0
      %v2180 = vmax.f32 %v2116, 0.0
      %v2181 = vmax.f32 %v2117, 0.0
      %v2182 = vmax.f32 %v2118, 0.0
      %v2183 = vmax.f32 %v2119, 0.0
      %v2184 = vmax.f32 %v2120, 0.0
      %v2185 = vmax.f32 %v2121, 0.0
      %v2186 = vmax.f32 %v2122, 0.0
      %v2187 = vmax.f32 %v2123, 0.0
      %v2188 = vmax.f32 %v2124, 0.0
      %v2189 = vmax.f32 %v2125, 0.0
      %v2190 = vmax.f32 %v2126, 0.0
      %v2191 = vmax.f32 %v2127, 0.0
      %v2192 = vmax.f32 %v2128, 0.0
      %v2193 = vmax.f32 %v2129, 0.0
      %v2194 = vmax.f32 %v2130, 0.0
      %v2195 = vmax.f32 %v2131, 0.0
      %v2196 = vmax.f32 %v2132, 0.0
      %v2197 = vmax.f32 %v2133, 0.0
      %v2198 = vmax.f32 %v2134, 0.0
      %v2199 = vmax.f32 %v2135, 0.0
      %v2200 = vmax.f32 %v2136, 0.0
      %v2201 = vmax.f32 %v2137, 0.0
      %v2202 = vmax.f32 %v2138, 0.0
      %v2203 = vmax.f32 %v2139, 0.0
      %v2204 = vmax.f32 %v2140, 0.0
      %v2205 = vmax.f32 %v2141, 0.0
      %v2206 = vmax.f32 %v2142, 0.0
      %v2207 = vpack.c.bf16 %v2144, %v2143
      %v2208 = vpack.c.bf16 %v2146, %v2145
      %v2209 = vpack.c.bf16 %v2148, %v2147
      %v2210 = vpack.c.bf16 %v2150, %v2149
      %v2211 = vpack.c.bf16 %v2152, %v2151
      %v2212 = vpack.c.bf16 %v2154, %v2153
      %v2213 = vpack.c.bf16 %v2156, %v2155
      %v2214 = vpack.c.bf16 %v2158, %v2157
      %v2215 = vpack.c.bf16 %v2160, %v2159
      %v2216 = vpack.c.bf16 %v2162, %v2161
      %v2217 = vpack.c.bf16 %v2164, %v2163
      %v2218 = vpack.c.bf16 %v2166, %v2165
      %v2219 = vpack.c.bf16 %v2168, %v2167
      %v2220 = vpack.c.bf16 %v2170, %v2169
      %v2221 = vpack.c.bf16 %v2172, %v2171
      %v2222 = vpack.c.bf16 %v2174, %v2173
      %v2223 = vpack.c.bf16 %v2176, %v2175
      %v2224 = vpack.c.bf16 %v2178, %v2177
      %v2225 = vpack.c.bf16 %v2180, %v2179
      %v2226 = vpack.c.bf16 %v2182, %v2181
      %v2227 = vpack.c.bf16 %v2184, %v2183
      %v2228 = vpack.c.bf16 %v2186, %v2185
      %v2229 = vpack.c.bf16 %v2188, %v2187
      %v2230 = vpack.c.bf16 %v2190, %v2189
      %v2231 = vpack.c.bf16 %v2192, %v2191
      %v2232 = vpack.c.bf16 %v2194, %v2193
      %v2233 = vpack.c.bf16 %v2196, %v2195
      %v2234 = vpack.c.bf16 %v2198, %v2197
      %v2235 = vpack.c.bf16 %v2200, %v2199
      %v2236 = vpack.c.bf16 %v2202, %v2201
      %v2237 = vpack.c.bf16 %v2204, %v2203
      %v2238 = vpack.c.bf16 %v2206, %v2205
      %v2271 = vunpack.c.l.b16 %v2207
      %v2272 = vunpack.c.h.b16 %v2207
      %v2273 = vunpack.c.l.b16 %v2208
      %v2274 = vunpack.c.h.b16 %v2208
      %v2275 = vunpack.c.l.b16 %v2209
      %v2276 = vunpack.c.h.b16 %v2209
      %v2277 = vunpack.c.l.b16 %v2210
      %v2278 = vunpack.c.h.b16 %v2210
      %v2279 = vunpack.c.l.b16 %v2211
      %v2280 = vunpack.c.h.b16 %v2211
      %v2281 = vunpack.c.l.b16 %v2212
      %v2282 = vunpack.c.h.b16 %v2212
      %v2283 = vunpack.c.l.b16 %v2213
      %v2284 = vunpack.c.h.b16 %v2213
      %v2285 = vunpack.c.l.b16 %v2214
      %v2286 = vunpack.c.h.b16 %v2214
      %v2287 = vunpack.c.l.b16 %v2215
      %v2288 = vunpack.c.h.b16 %v2215
      %v2289 = vunpack.c.l.b16 %v2216
      %v2290 = vunpack.c.h.b16 %v2216
      %v2291 = vunpack.c.l.b16 %v2217
      %v2292 = vunpack.c.h.b16 %v2217
      %v2293 = vunpack.c.l.b16 %v2218
      %v2294 = vunpack.c.h.b16 %v2218
      %v2295 = vunpack.c.l.b16 %v2219
      %v2296 = vunpack.c.h.b16 %v2219
      %v2297 = vunpack.c.l.b16 %v2220
      %v2298 = vunpack.c.h.b16 %v2220
      %v2299 = vunpack.c.l.b16 %v2221
      %v2300 = vunpack.c.h.b16 %v2221
      %v2301 = vunpack.c.l.b16 %v2222
      %v2302 = vunpack.c.h.b16 %v2222
      %v2303 = vunpack.c.l.b16 %v2223
      %v2304 = vunpack.c.h.b16 %v2223
      %v2305 = vunpack.c.l.b16 %v2224
      %v2306 = vunpack.c.h.b16 %v2224
      %v2307 = vunpack.c.l.b16 %v2225
      %v2308 = vunpack.c.h.b16 %v2225
      %v2309 = vunpack.c.l.b16 %v2226
      %v2310 = vunpack.c.h.b16 %v2226
      %v2311 = vunpack.c.l.b16 %v2227
      %v2312 = vunpack.c.h.b16 %v2227
      %v2313 = vunpack.c.l.b16 %v2228
      %v2314 = vunpack.c.h.b16 %v2228
      %v2315 = vunpack.c.l.b16 %v2229
      %v2316 = vunpack.c.h.b16 %v2229
      %v2317 = vunpack.c.l.b16 %v2230
      %v2318 = vunpack.c.h.b16 %v2230
      %v2319 = vunpack.c.l.b16 %v2231
      %v2320 = vunpack.c.h.b16 %v2231
      %v2321 = vunpack.c.l.b16 %v2232
      %v2322 = vunpack.c.h.b16 %v2232
      %v2323 = vunpack.c.l.b16 %v2233
      %v2324 = vunpack.c.h.b16 %v2233
      %v2325 = vunpack.c.l.b16 %v2234
      %v2326 = vunpack.c.h.b16 %v2234
      %v2327 = vunpack.c.l.b16 %v2235
      %v2328 = vunpack.c.h.b16 %v2235
      %v2329 = vunpack.c.l.b16 %v2236
      %v2330 = vunpack.c.h.b16 %v2236
      %v2331 = vunpack.c.l.b16 %v2237
      %v2332 = vunpack.c.h.b16 %v2237
      %v2333 = vunpack.c.l.b16 %v2238
      %v2334 = vunpack.c.h.b16 %v2238
      %v2335 = vpack.c.b16 %v2271, %v2271
      %v2336 = vpack.c.b16 %v2272, %v2272
      %v2337 = vpack.c.b16 %v2273, %v2273
      %v2338 = vpack.c.b16 %v2274, %v2274
      %v2339 = vpack.c.b16 %v2275, %v2275
      %v2340 = vpack.c.b16 %v2276, %v2276
      %v2341 = vpack.c.b16 %v2277, %v2277
      %v2342 = vpack.c.b16 %v2278, %v2278
      %v2343 = vpack.c.b16 %v2279, %v2279
      %v2344 = vpack.c.b16 %v2280, %v2280
      %v2345 = vpack.c.b16 %v2281, %v2281
      %v2346 = vpack.c.b16 %v2282, %v2282
      %v2347 = vpack.c.b16 %v2283, %v2283
      %v2348 = vpack.c.b16 %v2284, %v2284
      %v2349 = vpack.c.b16 %v2285, %v2285
      %v2350 = vpack.c.b16 %v2286, %v2286
      %v2351 = vpack.c.b16 %v2287, %v2287
      %v2352 = vpack.c.b16 %v2288, %v2288
      %v2353 = vpack.c.b16 %v2289, %v2289
      %v2354 = vpack.c.b16 %v2290, %v2290
      %v2355 = vpack.c.b16 %v2291, %v2291
      %v2356 = vpack.c.b16 %v2292, %v2292
      %v2357 = vpack.c.b16 %v2293, %v2293
      %v2358 = vpack.c.b16 %v2294, %v2294
      %v2359 = vpack.c.b16 %v2295, %v2295
      %v2360 = vpack.c.b16 %v2296, %v2296
      %v2361 = vpack.c.b16 %v2297, %v2297
      %v2362 = vpack.c.b16 %v2298, %v2298
      %v2363 = vpack.c.b16 %v2299, %v2299
      %v2364 = vpack.c.b16 %v2300, %v2300
      %v2365 = vpack.c.b16 %v2301, %v2301
      %v2366 = vpack.c.b16 %v2302, %v2302
      %v2367 = vpack.c.b16 %v2303, %v2303
      %v2368 = vpack.c.b16 %v2304, %v2304
      %v2369 = vpack.c.b16 %v2305, %v2305
      %v2370 = vpack.c.b16 %v2306, %v2306
      %v2371 = vpack.c.b16 %v2307, %v2307
      %v2372 = vpack.c.b16 %v2308, %v2308
      %v2373 = vpack.c.b16 %v2309, %v2309
      %v2374 = vpack.c.b16 %v2310, %v2310
      %v2375 = vpack.c.b16 %v2311, %v2311
      %v2376 = vpack.c.b16 %v2312, %v2312
      %v2377 = vpack.c.b16 %v2313, %v2313
      %v2378 = vpack.c.b16 %v2314, %v2314
      %v2379 = vpack.c.b16 %v2315, %v2315
      %v2380 = vpack.c.b16 %v2316, %v2316
      %v2381 = vpack.c.b16 %v2317, %v2317
      %v2382 = vpack.c.b16 %v2318, %v2318
      %v2383 = vpack.c.b16 %v2319, %v2319
      %v2384 = vpack.c.b16 %v2320, %v2320
      %v2385 = vpack.c.b16 %v2321, %v2321
      %v2386 = vpack.c.b16 %v2322, %v2322
      %v2387 = vpack.c.b16 %v2323, %v2323
      %v2388 = vpack.c.b16 %v2324, %v2324
      %v2389 = vpack.c.b16 %v2325, %v2325
      %v2390 = vpack.c.b16 %v2326, %v2326
      %v2391 = vpack.c.b16 %v2327, %v2327
      %v2392 = vpack.c.b16 %v2328, %v2328
      %v2393 = vpack.c.b16 %v2329, %v2329
      %v2394 = vpack.c.b16 %v2330, %v2330
      %v2395 = vpack.c.b16 %v2331, %v2331
      %v2396 = vpack.c.b16 %v2332, %v2332
      %v2397 = vpack.c.b16 %v2333, %v2333
      %v2398 = vpack.c.b16 %v2334, %v2334
      %2463 = vst [vmem:[%s194] sm:$0xf] %v2335
      %2464 = vst [vmem:[%s194 + $0x4] sm:$0xf] %v2336
      %2465 = vst [vmem:[%s194 + $0x8] sm:$0xf] %v2337
      %2466 = vst [vmem:[%s194 + $0xc] sm:$0xf] %v2338
      %2467 = vst [vmem:[%s194 + $0x10] sm:$0xf] %v2339
      %2468 = vst [vmem:[%s194 + $0x14] sm:$0xf] %v2340
      %2469 = vst [vmem:[%s194 + $0x18] sm:$0xf] %v2341
      %2470 = vst [vmem:[%s194 + $0x1c] sm:$0xf] %v2342
      %2471 = vst [vmem:[%s194 + $0x20] sm:$0xf] %v2343
      %2472 = vst [vmem:[%s194 + $0x24] sm:$0xf] %v2344
      %2473 = vst [vmem:[%s194 + $0x28] sm:$0xf] %v2345
      %2474 = vst [vmem:[%s194 + $0x2c] sm:$0xf] %v2346
      %2475 = vst [vmem:[%s194 + $0x30] sm:$0xf] %v2347
      %2476 = vst [vmem:[%s194 + $0x34] sm:$0xf] %v2348
      %2477 = vst [vmem:[%s194 + $0x38] sm:$0xf] %v2349
      %2478 = vst [vmem:[%s194 + $0x3c] sm:$0xf] %v2350
      %2479 = vst [vmem:[%s194 + $0x40] sm:$0xf] %v2351
      %2480 = vst [vmem:[%s194 + $0x44] sm:$0xf] %v2352
      %2481 = vst [vmem:[%s194 + $0x48] sm:$0xf] %v2353
      %2482 = vst [vmem:[%s194 + $0x4c] sm:$0xf] %v2354
      %2483 = vst [vmem:[%s194 + $0x50] sm:$0xf] %v2355
      %2484 = vst [vmem:[%s194 + $0x54] sm:$0xf] %v2356
      %2485 = vst [vmem:[%s194 + $0x58] sm:$0xf] %v2357
      %2486 = vst [vmem:[%s194 + $0x5c] sm:$0xf] %v2358
      %2487 = vst [vmem:[%s194 + $0x60] sm:$0xf] %v2359
      %2488 = vst [vmem:[%s194 + $0x64] sm:$0xf] %v2360
      %2489 = vst [vmem:[%s194 + $0x68] sm:$0xf] %v2361
      %2490 = vst [vmem:[%s194 + $0x6c] sm:$0xf] %v2362
      %2491 = vst [vmem:[%s194 + $0x70] sm:$0xf] %v2363
      %2492 = vst [vmem:[%s194 + $0x74] sm:$0xf] %v2364
      %2493 = vst [vmem:[%s194 + $0x78] sm:$0xf] %v2365
      %2494 = vst [vmem:[%s194 + $0x7c] sm:$0xf] %v2366
      %2495 = vst [vmem:[%s194 + $0x80] sm:$0xf] %v2367
      %2496 = vst [vmem:[%s194 + $0x84] sm:$0xf] %v2368
      %2497 = vst [vmem:[%s194 + $0x88] sm:$0xf] %v2369
      %2498 = vst [vmem:[%s194 + $0x8c] sm:$0xf] %v2370
      %2499 = vst [vmem:[%s194 + $0x90] sm:$0xf] %v2371
      %2500 = vst [vmem:[%s194 + $0x94] sm:$0xf] %v2372
      %2501 = vst [vmem:[%s194 + $0x98] sm:$0xf] %v2373
      %2502 = vst [vmem:[%s194 + $0x9c] sm:$0xf] %v2374
      %2503 = vst [vmem:[%s194 + $0xa0] sm:$0xf] %v2375
      %2504 = vst [vmem:[%s194 + $0xa4] sm:$0xf] %v2376
      %2505 = vst [vmem:[%s194 + $0xa8] sm:$0xf] %v2377
      %2506 = vst [vmem:[%s194 + $0xac] sm:$0xf] %v2378
      %2507 = vst [vmem:[%s194 + $0xb0] sm:$0xf] %v2379
      %2508 = vst [vmem:[%s194 + $0xb4] sm:$0xf] %v2380
      %2509 = vst [vmem:[%s194 + $0xb8] sm:$0xf] %v2381
      %2510 = vst [vmem:[%s194 + $0xbc] sm:$0xf] %v2382
      %2511 = vst [vmem:[%s194 + $0xc0] sm:$0xf] %v2383
      %2512 = vst [vmem:[%s194 + $0xc4] sm:$0xf] %v2384
      %2513 = vst [vmem:[%s194 + $0xc8] sm:$0xf] %v2385
      %2514 = vst [vmem:[%s194 + $0xcc] sm:$0xf] %v2386
      %2515 = vst [vmem:[%s194 + $0xd0] sm:$0xf] %v2387
      %2516 = vst [vmem:[%s194 + $0xd4] sm:$0xf] %v2388
      %2517 = vst [vmem:[%s194 + $0xd8] sm:$0xf] %v2389
      %2518 = vst [vmem:[%s194 + $0xdc] sm:$0xf] %v2390
      %2519 = vst [vmem:[%s194 + $0xe0] sm:$0xf] %v2391
      %2520 = vst [vmem:[%s194 + $0xe4] sm:$0xf] %v2392
      %2521 = vst [vmem:[%s194 + $0xe8] sm:$0xf] %v2393
      %2522 = vst [vmem:[%s194 + $0xec] sm:$0xf] %v2394
      %2523 = vst [vmem:[%s194 + $0xf0] sm:$0xf] %v2395
      %2524 = vst [vmem:[%s194 + $0xf4] sm:$0xf] %v2396
      %2525 = vst [vmem:[%s194 + $0xf8] sm:$0xf] %v2397
      %2526 = vst [vmem:[%s194 + $0xfc] sm:$0xf] %v2398
      %s2527 = smul.u32 32, %s19
      %p2528 = scmp.lt.s32.totalorder %s18, 1
      %s2529 = scalar_select %p2528, %s18, 1
      %p2530 = scmp.lt.s32.totalorder %s2527, 31
      %s2531 = scalar_select %p2530, %s2527, 31
      %s2532 = smul.addr %s2531, 2
      %s2533 = smul.addr %s2529, 64
      %s2534 = sadd.s32 %s2532, %s2533
      %s2535 = smul.addr %s2534, 4
      %s2536 = scalar_lea.vmem %s3, %s2535
      // Predicated region
      $region33: #{res_input_layer_fwd.1} parent=31 // pred_check
        %p2537 = pneg %p114
      $region34: #{res_input_layer_fwd.1} parent=31 // pred_check_branch
        %2539 = sbr.rel (%p2537) target = $region36
      $region35: #{res_input_layer_fwd.1} parent=31 // pred_region
        %s2540 = smul.u32 32, %s19
      $region36: #{res_input_layer_fwd.1} parent=31 // pred_fallthru
        _
    $region32: #{res_input_layer_fwd.1} parent=5 // pred_fallthru
      _
    %p2541 = scmp.le.s32.totalorder 2, %s9
    // Predicated region
    $region37: #{res_input_layer_fwd.1} parent=5 // pred_check
      %p2542 = pneg %p2541
    $region38: #{res_input_layer_fwd.1} parent=5 // pred_check_branch
      %2544 = sbr.rel (%p2542) target = $region40
    $region39: #{res_input_layer_fwd.1} parent=5 // pred_region
      %s2545 = ssub.s32 %s9, 2
      // Predicated region
      $region41: #{res_input_layer_fwd.1} parent=39 // pred_check
        %p2546 = pneg %p120
      $region42: #{res_input_layer_fwd.1} parent=39 // pred_check_branch
        %2548 = sbr.rel (%p2546) target = $region44
      $region43: #{res_input_layer_fwd.1} parent=39 // pred_region
        %s2549 = smul.u32 32, %s21
        %p2550 = scmp.lt.s32.totalorder %s20, 1
        %s2551 = scalar_select %p2550, %s20, 1
        %p2552 = scmp.lt.s32.totalorder %s2549, 31
        %s2553 = scalar_select %p2552, %s2549, 31
        %s2554 = smul.addr %s2553, 2
        %s2555 = smul.addr %s2551, 64
        %s2556 = sadd.s32 %s2554, %s2555
        %s2557 = smul.addr %s2556, 4
        %s2558 = scalar_lea.vmem %s3, %s2557
      $region44: #{res_input_layer_fwd.1} parent=39 // pred_fallthru
        _
    $region40: #{res_input_layer_fwd.1} parent=5 // pred_fallthru
      _
  $region6: #{res_input_layer_fwd.1} parent=0 // loop_footer
    %s13 = sadd.s32 1, %s9
  $region7: #{res_input_layer_fwd.1} parent=0 // loop_footer_branch
    %8 = sbr.rel target = $region3
  $region8: #{res_input_layer_fwd.1} parent=0 // loop_exit
    _

</llo_original>
